<compile_context>
chip_gen: v7x
topology: tpu7x:2x2x1
jax: 0.10.0
libtpu: 0.0.40
codegen_flags: <defaults>
</compile_context>

<pallas_src>
import jax
import jax.numpy as jnp
from jax.experimental import pallas as pl
from jax.experimental.pallas import tpu as pltpu


LANE = 128
SUBLANE = 8
TV_MAX = 2048   # vocab tile size (multiple of 128); keeps bf16 fc-weight tiles small


def _round_up(x, m):
    return (x + m - 1) // m * m


def decoder_kernel(
    emb_ref,        # [Bp, E]      f32   embedded input token
    hid_ref,        # [Bp, H]      f32   previous decoder hidden
    enc_ref,        # [Bp, S, E2]  bf16  encoder outputs
    encproj_ref,    # [Bp, S, H]   f32   hoisted enc @ attn_we + attn_b
    mask_ref,       # [Bp, S]      f32   1 = keep, 0 = masked
    attn_wh_ref,    # [H, H]       bf16  attention weight, hidden part (transposed)
    v_ref,          # [1, H]       f32   attention v
    wih_r_ref, wih_z_ref, wih_n_ref,   # [E+E2, H] bf16  GRU W_ih per gate
    whh_r_ref, whh_z_ref, whh_n_ref,   # [H, H]    bf16  GRU W_hh per gate
    bih_ref,        # [3, H] f32   rows (r, z, n)
    bhh_ref,        # [3, H] f32   rows (r, z, n)
    fcw_ref,        # [K, TV] bf16 fused fc_out weight tile, K = H+E2+E
    fcb_ref,        # [1, TV] f32  fc_out bias tile
    pred_ref,       # [Bp, TV] f32 out  (vocab tile)
    hid_out_ref,    # [Bp, H]  f32 out
    a_out_ref,      # [Bp, S]  f32 out
    xcat_ref,       # [Bp, K]  bf16 scratch; persists across vocab tiles
):
    j = pl.program_id(0)

    # Attention + context + GRU are vocab-independent: run once (first tile),
    # stash the fused activation row in VMEM scratch for the remaining tiles.
    @pl.when(j == 0)
    def _():
        hid = hid_ref[...]                                   # [Bp, H] f32
        hid_bf = hid.astype(jnp.bfloat16)
        emb = emb_ref[...]                                   # [Bp, E] f32
        enc_bf = enc_ref[...]                                # [Bp, S, E2] bf16
        mask = mask_ref[...]                                 # [Bp, S]

        # ---------------- Bahdanau attention ----------------
        hid_part = jnp.dot(hid_bf, attn_wh_ref[...],
                           preferred_element_type=jnp.float32)          # [Bp, H]
        energy = jnp.tanh(hid_part[:, None, :] + encproj_ref[...])      # [Bp, S, H]
        scores = jnp.sum(energy * v_ref[...], axis=-1)                  # [Bp, S]
        scores = jnp.where(mask > 0.0, scores, jnp.float32(-1e10))

        scores = scores - jnp.max(scores, axis=1, keepdims=True)
        e = jnp.exp(scores)
        a = e / jnp.sum(e, axis=1, keepdims=True)                        # [Bp, S]
        a_out_ref[...] = a

        # ---------------- weighted context (batched vec @ mat on MXU) ----------------
        a3 = a.astype(jnp.bfloat16)[:, None, :]                          # [Bp, 1, S]
        weighted = jnp.einsum('bqs,bse->bqe', a3, enc_bf,
                              preferred_element_type=jnp.float32)[:, 0, :]   # [Bp, E2]

        # ---------------- GRU cell, per-gate slabs with fused K ----------------
        rnn_in = jnp.concatenate([emb, weighted], axis=-1).astype(jnp.bfloat16)  # [Bp, E+E2]

        gi_r = jnp.dot(rnn_in, wih_r_ref[...], preferred_element_type=jnp.float32) + bih_ref[0:1, :]
        gi_z = jnp.dot(rnn_in, wih_z_ref[...], preferred_element_type=jnp.float32) + bih_ref[1:2, :]
        gi_n = jnp.dot(rnn_in, wih_n_ref[...], preferred_element_type=jnp.float32) + bih_ref[2:3, :]

        gh_r = jnp.dot(hid_bf, whh_r_ref[...], preferred_element_type=jnp.float32) + bhh_ref[0:1, :]
        gh_z = jnp.dot(hid_bf, whh_z_ref[...], preferred_element_type=jnp.float32) + bhh_ref[1:2, :]
        gh_n = jnp.dot(hid_bf, whh_n_ref[...], preferred_element_type=jnp.float32) + bhh_ref[2:3, :]

        r = jax.nn.sigmoid(gi_r + gh_r)
        z = jax.nn.sigmoid(gi_z + gh_z)
        n = jnp.tanh(gi_n + r * gh_n)
        h_new = (1.0 - z) * n + z * hid                                   # [Bp, H]
        hid_out_ref[...] = h_new

        # fused activation row for the vocab projection: cat(output, weighted, embedded)
        xcat_ref[...] = jnp.concatenate([h_new, weighted, emb],
                                        axis=-1).astype(jnp.bfloat16)     # [Bp, K]

    # ---------------- output projection, one lane-dense vocab tile ----------------
    pred_ref[...] = (jnp.dot(xcat_ref[...], fcw_ref[...],
                             preferred_element_type=jnp.float32)
                     + fcb_ref[...])


def _fixed(shape):
    """BlockSpec covering the full (non-tiled) array for every grid step."""
    nd = len(shape)
    return pl.BlockSpec(shape, lambda j, nd=nd: (0,) * nd)


def decoder_step(embedded, hidden, enc_bse, enc_proj, mask, kp):
    """embedded [B,E] f32, hidden [B,H] f32, enc_bse [B,S,E2] f32,
    enc_proj [B,S,H] f32 (hoisted attention keys), mask [B,S] f32."""
    B, E = embedded.shape
    H = hidden.shape[1]
    _, S, E2 = enc_bse.shape
    K = H + E2 + E
    Vp = kp["fc_w"].shape[1]
    TV = kp["tv"]
    V = kp["vocab"]
    Bp = _round_up(max(B, 1), SUBLANE)

    def pad_rows(x, value=0.0):
        pads = ((0, Bp - B),) + ((0, 0),) * (x.ndim - 1)
        return jnp.pad(x, pads, constant_values=value)

    emb_p = pad_rows(embedded).astype(jnp.float32)
    hid_p = pad_rows(hidden).astype(jnp.float32)
    enc_p = pad_rows(enc_bse).astype(jnp.bfloat16)
    encproj_p = pad_rows(enc_proj).astype(jnp.float32)
    mask_p = pad_rows(mask, value=1.0).astype(jnp.float32)

    in_specs = [
        _fixed((Bp, E)),            # embedded
        _fixed((Bp, H)),            # hidden
        _fixed((Bp, S, E2)),        # encoder outputs
        _fixed((Bp, S, H)),         # hoisted encoder projection
        _fixed((Bp, S)),            # mask
        _fixed((H, H)),             # attn_wh
        _fixed((1, H)),             # v
        _fixed((E + E2, H)),        # wih_r
        _fixed((E + E2, H)),        # wih_z
        _fixed((E + E2, H)),        # wih_n
        _fixed((H, H)),             # whh_r
        _fixed((H, H)),             # whh_z
        _fixed((H, H)),             # whh_n
        _fixed((3, H)),             # bih (per-gate rows)
        _fixed((3, H)),             # bhh (per-gate rows)
        pl.BlockSpec((K, TV), lambda j: (0, j)),   # fused fc weight, vocab-tiled
        pl.BlockSpec((1, TV), lambda j: (0, j)),   # fc bias, vocab-tiled
    ]
    out_specs = (
        pl.BlockSpec((Bp, TV), lambda j: (0, j)),  # prediction, vocab-tiled (lane-dense)
        _fixed((Bp, H)),                           # new hidden (written at j==0 only)
        _fixed((Bp, S)),                           # attention weights (written at j==0 only)
    )

    weight_arrays = (emb_p, hid_p, enc_p, encproj_p, mask_p,
                     kp["attn_wh"], kp["v"],
                     kp["wih_r"], kp["wih_z"], kp["wih_n"],
                     kp["whh_r"], kp["whh_z"], kp["whh_n"],
                     kp["bih3"], kp["bhh3"], kp["fc_w"], kp["fc_b"])
    bytes_accessed = sum(int(x.size) * x.dtype.itemsize for x in weight_arrays)
    bytes_accessed += Bp * Vp * 4 + Bp * H * 4 + Bp * S * 4
    flops = 2 * Bp * (K * Vp + (E + E2) * 3 * H + 4 * H * H + S * E2 + S * H)
    transcendentals = Bp * (S * H + S + 6 * H)

    out = pl.pallas_call(
        decoder_kernel,
        grid=(Vp // TV,),
        out_shape=(
            jax.ShapeDtypeStruct((Bp, Vp), jnp.float32),
            jax.ShapeDtypeStruct((Bp, H), jnp.float32),
            jax.ShapeDtypeStruct((Bp, S), jnp.float32),
        ),
        in_specs=in_specs,
        out_specs=out_specs,
        scratch_shapes=[pltpu.VMEM((Bp, K), jnp.bfloat16)],
        compiler_params=pltpu.CompilerParams(
            # hid/a output blocks are revisited across the vocab axis, so the
            # axis must be "arbitrary". (On v7x one could split those outputs
            # into a separate call and mark this axis "parallel" for 2 TCs.)
            dimension_semantics=("arbitrary",),
            vmem_limit_bytes=32 * 1024 * 1024,
        ),
        cost_estimate=pl.CostEstimate(
            flops=int(flops),
            transcendentals=int(transcendentals),
            bytes_accessed=int(bytes_accessed),
        ),
    )(
        emb_p, hid_p, enc_p, encproj_p, mask_p,
        kp["attn_wh"], kp["v"],
        kp["wih_r"], kp["wih_z"], kp["wih_n"],
        kp["whh_r"], kp["whh_z"], kp["whh_n"],
        kp["bih3"], kp["bhh3"], kp["fc_w"], kp["fc_b"],
    )
    pred_p, hid_p_out, a_p_out = out
    return pred_p[:B, :V], hid_p_out[:B], a_p_out[:B]


def precompute_attention_keys(enc_bse, kp):
    """Step-invariant Bahdanau keys U_a*h_j + b, hoisted out of the per-step kernel."""
    return jnp.einsum('bse,eh->bsh', enc_bse, kp["attn_we"]) + kp["attn_b"]


def make_params(key, output_dim, emb_dim, enc_hid_dim, dec_hid_dim):
    E = emb_dim
    E2 = enc_hid_dim * 2
    H = dec_hid_dim
    V = output_dim
    ks = jax.random.split(key, 12)
    f = lambda k, shape: (0.1 * jax.random.normal(k, shape)).astype(jnp.float32)

    return {
        # embedding table [V, E]
        "emb_table": f(ks[0], (V, E)),
        # attention: Linear(E2 + H, H) split into transposed slabs
        "attn_wh": f(ks[1], (H, H)),
        "attn_we": f(ks[2], (E2, H)),
        "attn_b": f(ks[3], (1, H)),
        # attention v: Linear(H, 1, bias=False) stored as [1, H]
        "v": f(ks[4], (1, H)),
        # GRU(E2 + E, H): W_ih split by cat(embedded, weighted) order
        "wih_emb": f(ks[5], (E, 3 * H)),
        "wih_ctx": f(ks[6], (E2, 3 * H)),
        "bih": f(ks[7], (1, 3 * H)),
        "whh": f(ks[8], (H, 3 * H)),
        "bhh": f(ks[9], (1, 3 * H)),
        # fc_out: Linear(H + E2 + E, V) split by cat(output, weighted, embedded)
        "fc_h": f(ks[10], (H, V)),
        "fc_ctx": f(ks[11], (E2, V)),
        "fc_emb": f(jax.random.fold_in(key, 100), (E, V)),
        "fc_b": f(jax.random.fold_in(key, 101), (1, V)),
    }


def prep_params(p, tv_max=TV_MAX):
    """Fuse / split / pad / cast the logical params into kernel-ready form."""
    H = p["attn_wh"].shape[0]
    E = p["wih_emb"].shape[0]
    E2 = p["wih_ctx"].shape[0]
    V = p["fc_b"].shape[1]
    bf = jnp.bfloat16

    tv = min(tv_max, _round_up(V, LANE))
    vp = _round_up(V, tv)

    # GRU: fuse K (emb + ctx), split into per-gate slabs (torch gate order r,z,n)
    wih = jnp.concatenate([p["wih_emb"], p["wih_ctx"]], axis=0)          # [E+E2, 3H]
    whh = p["whh"]                                                       # [H, 3H]
    # fc_out: fuse K = H + E2 + E, pad vocab to a multiple of the tile
    fc_w = jnp.concatenate([p["fc_h"], p["fc_ctx"], p["fc_emb"]], axis=0)  # [K, V]
    fc_w = jnp.pad(fc_w, ((0, 0), (0, vp - V)))
    fc_b = jnp.pad(p["fc_b"], ((0, 0), (0, vp - V)))

    return {
        "tv": tv,
        "vocab": V,
        "attn_we": p["attn_we"].astype(jnp.float32),   # used wrapper-side (hoisted keys)
        "attn_b": p["attn_b"].astype(jnp.float32),
        "attn_wh": p["attn_wh"].astype(bf),
        "v": p["v"].astype(jnp.float32),
        "wih_r": wih[:, 0:H].astype(bf),
        "wih_z": wih[:, H:2 * H].astype(bf),
        "wih_n": wih[:, 2 * H:3 * H].astype(bf),
        "whh_r": whh[:, 0:H].astype(bf),
        "whh_z": whh[:, H:2 * H].astype(bf),
        "whh_n": whh[:, 2 * H:3 * H].astype(bf),
        "bih3": p["bih"].reshape(3, H).astype(jnp.float32),
        "bhh3": p["bhh"].reshape(3, H).astype(jnp.float32),
        "fc_w": fc_w.astype(bf),
        "fc_b": fc_b.astype(jnp.float32),
    }


def decoder_ref(emb, hid, enc, mask, p):
    """Pure-JAX f32 reference of the same decode step."""
    H = hid.shape[1]
    hid_part = hid @ p["attn_wh"]
    enc_part = jnp.einsum('bse,eh->bsh', enc, p["attn_we"])
    energy = jnp.tanh(hid_part[:, None, :] + enc_part + p["attn_b"])
    scores = jnp.sum(energy * p["v"], axis=-1)
    scores = jnp.where(mask > 0.0, scores, -1e10)
    a = jax.nn.softmax(scores, axis=1)
    weighted = jnp.einsum('bs,bse->be', a, enc)
    gi = emb @ p["wih_emb"] + weighted @ p["wih_ctx"] + p["bih"]
    gh = hid @ p["whh"] + p["bhh"]
    r = jax.nn.sigmoid(gi[:, :H] + gh[:, :H])
    z = jax.nn.sigmoid(gi[:, H:2 * H] + gh[:, H:2 * H])
    n = jnp.tanh(gi[:, 2 * H:] + r * gh[:, 2 * H:])
    h_new = (1.0 - z) * n + z * hid
    pred = h_new @ p["fc_h"] + weighted @ p["fc_ctx"] + emb @ p["fc_emb"] + p["fc_b"]
    return pred, h_new, a


if __name__ == "__main__":
    # Small shapes consistent with the module.
    output_dim = 32     # vocab size
    emb_dim = 16
    enc_hid_dim = 16    # -> encoder outputs have 2*enc_hid_dim = 32 features
    dec_hid_dim = 32
    src_len = 8
    batch = 2

    key = jax.random.PRNGKey(0)
    k_tok, k_hid, k_enc, k_par = jax.random.split(key, 4)

    params = make_params(k_par, output_dim, emb_dim, enc_hid_dim, dec_hid_dim)
    kparams = prep_params(params)

    # PyTorch-style inputs
    input_tokens = jax.random.randint(k_tok, (batch,), 0, output_dim)          # [B]
    hidden = jax.random.normal(k_hid, (batch, dec_hid_dim), jnp.float32)       # [B, H]
    enc_sbe = jax.random.normal(k_enc, (src_len, batch, 2 * enc_hid_dim),
                                jnp.float32)                                   # [S, B, E2]
    lengths = jnp.array([src_len, src_len - 3], dtype=jnp.int32)
    mask = (jnp.arange(src_len)[None, :] < lengths[:, None]).astype(jnp.float32)  # [B, S]

    # Glue: embedding lookup (dropout is identity in eval mode) + batch-major layout.
    embedded = params["emb_table"][input_tokens]                               # [B, E]
    enc_bse = jnp.transpose(enc_sbe, (1, 0, 2))                                # [B, S, E2]

    # Step-invariant attention keys, hoisted out of the per-step kernel.
    enc_proj = precompute_attention_keys(enc_bse, kparams)                     # [B, S, H]

    prediction, new_hidden, attn = decoder_step(
        embedded, hidden, enc_bse, enc_proj, mask, kparams)
    jax.block_until_ready((prediction, new_hidden, attn))

    assert prediction.shape == (batch, output_dim)
    assert new_hidden.shape == (batch, dec_hid_dim)
    assert attn.shape == (batch, src_len)
    # attention weights must sum to 1 over source positions
    assert jnp.allclose(jnp.sum(attn, axis=1), 1.0, atol=1e-5)

    # correctness vs. pure-JAX f32 reference (bf16 matmuls -> loose tolerance)
    p_ref, h_ref, a_ref = decoder_ref(embedded, hidden, enc_bse, mask, params)
    assert jnp.allclose(attn, a_ref, atol=2e-2), float(jnp.max(jnp.abs(attn - a_ref)))
    assert jnp.allclose(new_hidden, h_ref, atol=2e-2), float(jnp.max(jnp.abs(new_hidden - h_ref)))
    assert jnp.allclose(prediction, p_ref, atol=3e-2), float(jnp.max(jnp.abs(prediction - p_ref)))

    print("KERNEL_OK")
</pallas_src>

<mosaic_0001>
module attributes {stable_mosaic.version = 11 : i64} {
  func.func @decoder_kernel(%arg0: i32, %arg1: memref<8x16xf32, #tpu.memory_space<vmem>>, %arg2: memref<8x32xf32, #tpu.memory_space<vmem>>, %arg3: memref<8x8x32xbf16, #tpu.memory_space<vmem>>, %arg4: memref<8x8x32xf32, #tpu.memory_space<vmem>>, %arg5: memref<8x8xf32, #tpu.memory_space<vmem>>, %arg6: memref<32x32xbf16, #tpu.memory_space<vmem>>, %arg7: memref<1x32xf32, #tpu.memory_space<vmem>>, %arg8: memref<48x32xbf16, #tpu.memory_space<vmem>>, %arg9: memref<48x32xbf16, #tpu.memory_space<vmem>>, %arg10: memref<48x32xbf16, #tpu.memory_space<vmem>>, %arg11: memref<32x32xbf16, #tpu.memory_space<vmem>>, %arg12: memref<32x32xbf16, #tpu.memory_space<vmem>>, %arg13: memref<32x32xbf16, #tpu.memory_space<vmem>>, %arg14: memref<3x32xf32, #tpu.memory_space<vmem>>, %arg15: memref<3x32xf32, #tpu.memory_space<vmem>>, %arg16: memref<80x128xbf16, #tpu.memory_space<vmem>>, %arg17: memref<1x128xf32, #tpu.memory_space<vmem>>, %arg18: memref<8x128xf32, #tpu.memory_space<vmem>>, %arg19: memref<8x32xf32, #tpu.memory_space<vmem>>, %arg20: memref<8x8xf32, #tpu.memory_space<vmem>>, %arg21: memref<8x80xbf16, #tpu.memory_space<vmem>>) attributes {dimension_semantics = [#tpu.dimension_semantics<arbitrary>], iteration_bounds = array<i64: 1>, scalar_prefetch = 0 : i64, scratch_operands = 1 : i64, tpu.core_type = #tpu.core_type<tc>, window_params = [{pipeline_mode = #tpu.pipeline_mode<synchronous>, transform_indices = @transform_0, window_bounds = array<i64: 8, 16>}, {pipeline_mode = #tpu.pipeline_mode<synchronous>, transform_indices = @transform_1, window_bounds = array<i64: 8, 32>}, {pipeline_mode = #tpu.pipeline_mode<synchronous>, transform_indices = @transform_2, window_bounds = array<i64: 8, 8, 32>}, {pipeline_mode = #tpu.pipeline_mode<synchronous>, transform_indices = @transform_3, window_bounds = array<i64: 8, 8, 32>}, {pipeline_mode = #tpu.pipeline_mode<synchronous>, transform_indices = @transform_4, window_bounds = array<i64: 8, 8>}, {pipeline_mode = #tpu.pipeline_mode<synchronous>, transform_indices = @transform_5, window_bounds = array<i64: 32, 32>}, {pipeline_mode = #tpu.pipeline_mode<synchronous>, transform_indices = @transform_6, window_bounds = array<i64: 1, 32>}, {pipeline_mode = #tpu.pipeline_mode<synchronous>, transform_indices = @transform_7, window_bounds = array<i64: 48, 32>}, {pipeline_mode = #tpu.pipeline_mode<synchronous>, transform_indices = @transform_8, window_bounds = array<i64: 48, 32>}, {pipeline_mode = #tpu.pipeline_mode<synchronous>, transform_indices = @transform_9, window_bounds = array<i64: 48, 32>}, {pipeline_mode = #tpu.pipeline_mode<synchronous>, transform_indices = @transform_10, window_bounds = array<i64: 32, 32>}, {pipeline_mode = #tpu.pipeline_mode<synchronous>, transform_indices = @transform_11, window_bounds = array<i64: 32, 32>}, {pipeline_mode = #tpu.pipeline_mode<synchronous>, transform_indices = @transform_12, window_bounds = array<i64: 32, 32>}, {pipeline_mode = #tpu.pipeline_mode<synchronous>, transform_indices = @transform_13, window_bounds = array<i64: 3, 32>}, {pipeline_mode = #tpu.pipeline_mode<synchronous>, transform_indices = @transform_14, window_bounds = array<i64: 3, 32>}, {transform_indices = @transform_15, window_bounds = array<i64: 80, 128>}, {transform_indices = @transform_16, window_bounds = array<i64: 1, 128>}, {transform_indices = @transform_17, window_bounds = array<i64: 8, 128>}, {pipeline_mode = #tpu.pipeline_mode<synchronous>, transform_indices = @transform_18, window_bounds = array<i64: 8, 32>}, {pipeline_mode = #tpu.pipeline_mode<synchronous>, transform_indices = @transform_19, window_bounds = array<i64: 8, 8>}]} {
    %c0_i32 = arith.constant 0 : i32
    %0 = arith.cmpi eq, %arg0, %c0_i32 : i32
    %1 = arith.extui %0 : i1 to i32
    %c0_i32_0 = arith.constant 0 : i32
    %2 = arith.cmpi ne, %1, %c0_i32_0 : i32
    scf.if %2 {
      %c0_8 = arith.constant 0 : index
      %c0_9 = arith.constant 0 : index
      %10 = vector.load %arg2[%c0_8, %c0_9] : memref<8x32xf32, #tpu.memory_space<vmem>>, vector<8x32xf32>
      %11 = arith.truncf %10 : vector<8x32xf32> to vector<8x32xbf16>
      %c0_10 = arith.constant 0 : index
      %c0_11 = arith.constant 0 : index
      %12 = vector.load %arg1[%c0_10, %c0_11] : memref<8x16xf32, #tpu.memory_space<vmem>>, vector<8x16xf32>
      %c0_12 = arith.constant 0 : index
      %c0_13 = arith.constant 0 : index
      %c0_14 = arith.constant 0 : index
      %13 = vector.load %arg3[%c0_12, %c0_13, %c0_14] : memref<8x8x32xbf16, #tpu.memory_space<vmem>>, vector<8x8x32xbf16>
      %c0_15 = arith.constant 0 : index
      %c0_16 = arith.constant 0 : index
      %14 = vector.load %arg5[%c0_15, %c0_16] : memref<8x8xf32, #tpu.memory_space<vmem>>, vector<8x8xf32>
      %c0_17 = arith.constant 0 : index
      %c0_18 = arith.constant 0 : index
      %15 = vector.load %arg6[%c0_17, %c0_18] : memref<32x32xbf16, #tpu.memory_space<vmem>>, vector<32x32xbf16>
      %cst_19 = arith.constant dense<0.000000e+00> : vector<8x32xf32>
      %16 = tpu.matmul %11, %15, %cst_19 {dimension_numbers = #tpu.dot_dimension_numbers<[1], [0], [0], [1], [0, 0, 1, 1], [], []>} : vector<8x32xbf16>, vector<32x32xbf16>, vector<8x32xf32> -> vector<8x32xf32>
      %17 = vector.shape_cast %16 : vector<8x32xf32> to vector<8x1x32xf32>
      %c0_20 = arith.constant 0 : index
      %c0_21 = arith.constant 0 : index
      %c0_22 = arith.constant 0 : index
      %18 = vector.load %arg4[%c0_20, %c0_21, %c0_22] : memref<8x8x32xf32, #tpu.memory_space<vmem>>, vector<8x8x32xf32>
      %19 = vector.broadcast %17 : vector<8x1x32xf32> to vector<8x8x32xf32>
      %20 = arith.addf %19, %18 : vector<8x8x32xf32>
      %21 = math.tanh %20 : vector<8x8x32xf32>
      %c0_23 = arith.constant 0 : index
      %c0_24 = arith.constant 0 : index
      %22 = vector.load %arg7[%c0_23, %c0_24] : memref<1x32xf32, #tpu.memory_space<vmem>>, vector<1x32xf32>
      %23 = vector.shape_cast %22 : vector<1x32xf32> to vector<1x1x32xf32>
      %24 = vector.broadcast %23 : vector<1x1x32xf32> to vector<8x8x32xf32>
      %25 = arith.mulf %21, %24 : vector<8x8x32xf32>
      %cst_25 = arith.constant dense<0.000000e+00> : vector<8x8xf32>
      %26 = vector.multi_reduction <add>, %25, %cst_25 [2] : vector<8x8x32xf32> to vector<8x8xf32>
      %cst_26 = arith.constant 0.000000e+00 : f32
      %27 = vector.broadcast %cst_26 : f32 to vector<8x8xf32>
      %28 = arith.cmpf ogt, %14, %27 : vector<8x8xf32>
      %cst_27 = arith.constant -1.000000e+10 : f32
      %29 = vector.broadcast %cst_27 : f32 to vector<8x8xf32>
      %30 = arith.select %28, %26, %29 : vector<8x8xi1>, vector<8x8xf32>
      %cst_28 = arith.constant dense<0xFF800000> : vector<8xf32>
      %31 = vector.multi_reduction <maximumf>, %30, %cst_28 [1] : vector<8x8xf32> to vector<8xf32>
      %32 = vector.shape_cast %31 : vector<8xf32> to vector<8x1xf32>
      %33 = vector.broadcast %32 : vector<8x1xf32> to vector<8x8xf32>
      %34 = arith.subf %30, %33 : vector<8x8xf32>
      %35 = math.exp %34 : vector<8x8xf32>
      %cst_29 = arith.constant dense<0.000000e+00> : vector<8xf32>
      %36 = vector.multi_reduction <add>, %35, %cst_29 [1] : vector<8x8xf32> to vector<8xf32>
      %37 = vector.shape_cast %36 : vector<8xf32> to vector<8x1xf32>
      %38 = vector.broadcast %37 : vector<8x1xf32> to vector<8x8xf32>
      %39 = arith.divf %35, %38 : vector<8x8xf32>
      %c0_30 = arith.constant 0 : index
      %c0_31 = arith.constant 0 : index
      %40 = vector.load %arg20[%c0_30, %c0_31] : memref<8x8xf32, #tpu.memory_space<vmem>>, vector<8x8xf32>
      tpu.vector_store %arg20[%c0_30, %c0_31], %39 {strides = array<i32>} : memref<8x8xf32, #tpu.memory_space<vmem>>, vector<8x8xf32>,
      %41 = arith.truncf %39 : vector<8x8xf32> to vector<8x8xbf16>
      %42 = vector.shape_cast %41 : vector<8x8xbf16> to vector<8x1x8xbf16>
      "tpu.trace_start"() <{level = 10 : i32, message = "bqs,bse->bqe"}> : () -> ()
      %cst_32 = arith.constant dense<0.000000e+00> : vector<8x1x32xf32>
      %43 = tpu.matmul %42, %13, %cst_32 {dimension_numbers = #tpu.dot_dimension_numbers<[2], [1], [1], [2], [0, 0, 0, 1, 1, 2], [0], [0]>} : vector<8x1x8xbf16>, vector<8x8x32xbf16>, vector<8x1x32xf32> -> vector<8x1x32xf32>
      "tpu.trace_stop"() : () -> ()
      %44 = vector.shape_cast %43 : vector<8x1x32xf32> to vector<8x32xf32>
      %45 = tpu.concatenate %12, %44 in 1 : vector<8x16xf32>, vector<8x32xf32> -> vector<8x48xf32>
      %46 = arith.truncf %45 : vector<8x48xf32> to vector<8x48xbf16>
      %c0_33 = arith.constant 0 : index
      %c0_34 = arith.constant 0 : index
      %47 = vector.load %arg8[%c0_33, %c0_34] : memref<48x32xbf16, #tpu.memory_space<vmem>>, vector<48x32xbf16>
      %cst_35 = arith.constant dense<0.000000e+00> : vector<8x32xf32>
      %48 = tpu.matmul %46, %47, %cst_35 {dimension_numbers = #tpu.dot_dimension_numbers<[1], [0], [0], [1], [0, 0, 1, 1], [], []>} : vector<8x48xbf16>, vector<48x32xbf16>, vector<8x32xf32> -> vector<8x32xf32>
      %c0_36 = arith.constant 0 : index
      %c0_37 = arith.constant 0 : index
      %49 = vector.load %arg14[%c0_36, %c0_37] : memref<3x32xf32, #tpu.memory_space<vmem>>, vector<1x32xf32>
      %50 = vector.broadcast %49 : vector<1x32xf32> to vector<8x32xf32>
      %51 = arith.addf %48, %50 : vector<8x32xf32>
      %c0_38 = arith.constant 0 : index
      %c0_39 = arith.constant 0 : index
      %52 = vector.load %arg9[%c0_38, %c0_39] : memref<48x32xbf16, #tpu.memory_space<vmem>>, vector<48x32xbf16>
      %cst_40 = arith.constant dense<0.000000e+00> : vector<8x32xf32>
      %53 = tpu.matmul %46, %52, %cst_40 {dimension_numbers = #tpu.dot_dimension_numbers<[1], [0], [0], [1], [0, 0, 1, 1], [], []>} : vector<8x48xbf16>, vector<48x32xbf16>, vector<8x32xf32> -> vector<8x32xf32>
      %c1 = arith.constant 1 : index
      %c0_41 = arith.constant 0 : index
      %54 = vector.load %arg14[%c1, %c0_41] : memref<3x32xf32, #tpu.memory_space<vmem>>, vector<1x32xf32>
      %55 = vector.broadcast %54 : vector<1x32xf32> to vector<8x32xf32>
      %56 = arith.addf %53, %55 : vector<8x32xf32>
      %c0_42 = arith.constant 0 : index
      %c0_43 = arith.constant 0 : index
      %57 = vector.load %arg10[%c0_42, %c0_43] : memref<48x32xbf16, #tpu.memory_space<vmem>>, vector<48x32xbf16>
      %cst_44 = arith.constant dense<0.000000e+00> : vector<8x32xf32>
      %58 = tpu.matmul %46, %57, %cst_44 {dimension_numbers = #tpu.dot_dimension_numbers<[1], [0], [0], [1], [0, 0, 1, 1], [], []>} : vector<8x48xbf16>, vector<48x32xbf16>, vector<8x32xf32> -> vector<8x32xf32>
      %c2 = arith.constant 2 : index
      %c0_45 = arith.constant 0 : index
      %59 = vector.load %arg14[%c2, %c0_45] : memref<3x32xf32, #tpu.memory_space<vmem>>, vector<1x32xf32>
      %60 = vector.broadcast %59 : vector<1x32xf32> to vector<8x32xf32>
      %61 = arith.addf %58, %60 : vector<8x32xf32>
      %c0_46 = arith.constant 0 : index
      %c0_47 = arith.constant 0 : index
      %62 = vector.load %arg11[%c0_46, %c0_47] : memref<32x32xbf16, #tpu.memory_space<vmem>>, vector<32x32xbf16>
      %cst_48 = arith.constant dense<0.000000e+00> : vector<8x32xf32>
      %63 = tpu.matmul %11, %62, %cst_48 {dimension_numbers = #tpu.dot_dimension_numbers<[1], [0], [0], [1], [0, 0, 1, 1], [], []>} : vector<8x32xbf16>, vector<32x32xbf16>, vector<8x32xf32> -> vector<8x32xf32>
      %c0_49 = arith.constant 0 : index
      %c0_50 = arith.constant 0 : index
      %64 = vector.load %arg15[%c0_49, %c0_50] : memref<3x32xf32, #tpu.memory_space<vmem>>, vector<1x32xf32>
      %65 = vector.broadcast %64 : vector<1x32xf32> to vector<8x32xf32>
      %66 = arith.addf %63, %65 : vector<8x32xf32>
      %c0_51 = arith.constant 0 : index
      %c0_52 = arith.constant 0 : index
      %67 = vector.load %arg12[%c0_51, %c0_52] : memref<32x32xbf16, #tpu.memory_space<vmem>>, vector<32x32xbf16>
      %cst_53 = arith.constant dense<0.000000e+00> : vector<8x32xf32>
      %68 = tpu.matmul %11, %67, %cst_53 {dimension_numbers = #tpu.dot_dimension_numbers<[1], [0], [0], [1], [0, 0, 1, 1], [], []>} : vector<8x32xbf16>, vector<32x32xbf16>, vector<8x32xf32> -> vector<8x32xf32>
      %c1_54 = arith.constant 1 : index
      %c0_55 = arith.constant 0 : index
      %69 = vector.load %arg15[%c1_54, %c0_55] : memref<3x32xf32, #tpu.memory_space<vmem>>, vector<1x32xf32>
      %70 = vector.broadcast %69 : vector<1x32xf32> to vector<8x32xf32>
      %71 = arith.addf %68, %70 : vector<8x32xf32>
      %c0_56 = arith.constant 0 : index
      %c0_57 = arith.constant 0 : index
      %72 = vector.load %arg13[%c0_56, %c0_57] : memref<32x32xbf16, #tpu.memory_space<vmem>>, vector<32x32xbf16>
      %cst_58 = arith.constant dense<0.000000e+00> : vector<8x32xf32>
      %73 = tpu.matmul %11, %72, %cst_58 {dimension_numbers = #tpu.dot_dimension_numbers<[1], [0], [0], [1], [0, 0, 1, 1], [], []>} : vector<8x32xbf16>, vector<32x32xbf16>, vector<8x32xf32> -> vector<8x32xf32>
      %c2_59 = arith.constant 2 : index
      %c0_60 = arith.constant 0 : index
      %74 = vector.load %arg15[%c2_59, %c0_60] : memref<3x32xf32, #tpu.memory_space<vmem>>, vector<1x32xf32>
      %75 = vector.broadcast %74 : vector<1x32xf32> to vector<8x32xf32>
      %76 = arith.addf %73, %75 : vector<8x32xf32>
      %77 = arith.addf %51, %66 : vector<8x32xf32>
      %78 = arith.negf %77 : vector<8x32xf32>
      %79 = math.exp %78 : vector<8x32xf32>
      %cst_61 = arith.constant 1.000000e+00 : f32
      %80 = vector.broadcast %cst_61 : f32 to vector<8x32xf32>
      %81 = arith.addf %80, %79 : vector<8x32xf32>
      %82 = arith.divf %80, %81 : vector<8x32xf32>
      %83 = arith.addf %56, %71 : vector<8x32xf32>
      %84 = arith.negf %83 : vector<8x32xf32>
      %85 = math.exp %84 : vector<8x32xf32>
      %cst_62 = arith.constant 1.000000e+00 : f32
      %86 = vector.broadcast %cst_62 : f32 to vector<8x32xf32>
      %87 = arith.addf %86, %85 : vector<8x32xf32>
      %88 = arith.divf %86, %87 : vector<8x32xf32>
      %89 = arith.mulf %82, %76 : vector<8x32xf32>
      %90 = arith.addf %61, %89 : vector<8x32xf32>
      %91 = math.tanh %90 : vector<8x32xf32>
      %cst_63 = arith.constant 1.000000e+00 : f32
      %92 = vector.broadcast %cst_63 : f32 to vector<8x32xf32>
      %93 = arith.subf %92, %88 : vector<8x32xf32>
      %94 = arith.mulf %93, %91 : vector<8x32xf32>
      %95 = arith.mulf %88, %10 : vector<8x32xf32>
      %96 = arith.addf %94, %95 : vector<8x32xf32>
      %c0_64 = arith.constant 0 : index
      %c0_65 = arith.constant 0 : index
      %97 = vector.load %arg19[%c0_64, %c0_65] : memref<8x32xf32, #tpu.memory_space<vmem>>, vector<8x32xf32>
      tpu.vector_store %arg19[%c0_64, %c0_65], %96 {strides = array<i32>} : memref<8x32xf32, #tpu.memory_space<vmem>>, vector<8x32xf32>,
      %98 = tpu.concatenate %96, %44, %12 in 1 : vector<8x32xf32>, vector<8x32xf32>, vector<8x16xf32> -> vector<8x80xf32>
      %99 = arith.truncf %98 : vector<8x80xf32> to vector<8x80xbf16>
      %c0_66 = arith.constant 0 : index
      %c0_67 = arith.constant 0 : index
      %100 = vector.load %arg21[%c0_66, %c0_67] : memref<8x80xbf16, #tpu.memory_space<vmem>>, vector<8x80xbf16>
      tpu.vector_store %arg21[%c0_66, %c0_67], %99 {strides = array<i32>} : memref<8x80xbf16, #tpu.memory_space<vmem>>, vector<8x80xbf16>,
    } else {
    }
    %c0 = arith.constant 0 : index
    %c0_1 = arith.constant 0 : index
    %3 = vector.load %arg21[%c0, %c0_1] : memref<8x80xbf16, #tpu.memory_space<vmem>>, vector<8x80xbf16>
    %c0_2 = arith.constant 0 : index
    %c0_3 = arith.constant 0 : index
    %4 = vector.load %arg16[%c0_2, %c0_3] : memref<80x128xbf16, #tpu.memory_space<vmem>>, vector<80x128xbf16>
    %cst = arith.constant dense<0.000000e+00> : vector<8x128xf32>
    %5 = tpu.matmul %3, %4, %cst {dimension_numbers = #tpu.dot_dimension_numbers<[1], [0], [0], [1], [0, 0, 1, 1], [], []>} : vector<8x80xbf16>, vector<80x128xbf16>, vector<8x128xf32> -> vector<8x128xf32>
    %c0_4 = arith.constant 0 : index
    %c0_5 = arith.constant 0 : index
    %6 = vector.load %arg17[%c0_4, %c0_5] : memref<1x128xf32, #tpu.memory_space<vmem>>, vector<1x128xf32>
    %7 = vector.broadcast %6 : vector<1x128xf32> to vector<8x128xf32>
    %8 = arith.addf %5, %7 : vector<8x128xf32>
    %c0_6 = arith.constant 0 : index
    %c0_7 = arith.constant 0 : index
    %9 = vector.load %arg18[%c0_6, %c0_7] : memref<8x128xf32, #tpu.memory_space<vmem>>, vector<8x128xf32>
    tpu.vector_store %arg18[%c0_6, %c0_7], %8 {strides = array<i32>} : memref<8x128xf32, #tpu.memory_space<vmem>>, vector<8x128xf32>,
    return
  }
  func.func @transform_0(%arg0: i32) -> (i32, i32) {
    %c0_i32 = arith.constant 0 : i32
    %c0_i32_0 = arith.constant 0 : i32
    %c0_i32_1 = arith.constant 0 : i32
    return %c0_i32, %c0_i32_0 : i32, i32
  }
  func.func @transform_1(%arg0: i32) -> (i32, i32) {
    %c0_i32 = arith.constant 0 : i32
    %c0_i32_0 = arith.constant 0 : i32
    %c0_i32_1 = arith.constant 0 : i32
    return %c0_i32, %c0_i32_0 : i32, i32
  }
  func.func @transform_2(%arg0: i32) -> (i32, i32, i32) {
    %c0_i32 = arith.constant 0 : i32
    %c0_i32_0 = arith.constant 0 : i32
    %c0_i32_1 = arith.constant 0 : i32
    %c0_i32_2 = arith.constant 0 : i32
    return %c0_i32, %c0_i32_0, %c0_i32_1 : i32, i32, i32
  }
  func.func @transform_3(%arg0: i32) -> (i32, i32, i32) {
    %c0_i32 = arith.constant 0 : i32
    %c0_i32_0 = arith.constant 0 : i32
    %c0_i32_1 = arith.constant 0 : i32
    %c0_i32_2 = arith.constant 0 : i32
    return %c0_i32, %c0_i32_0, %c0_i32_1 : i32, i32, i32
  }
  func.func @transform_4(%arg0: i32) -> (i32, i32) {
    %c0_i32 = arith.constant 0 : i32
    %c0_i32_0 = arith.constant 0 : i32
    %c0_i32_1 = arith.constant 0 : i32
    return %c0_i32, %c0_i32_0 : i32, i32
  }
  func.func @transform_5(%arg0: i32) -> (i32, i32) {
    %c0_i32 = arith.constant 0 : i32
    %c0_i32_0 = arith.constant 0 : i32
    %c0_i32_1 = arith.constant 0 : i32
    return %c0_i32, %c0_i32_0 : i32, i32
  }
  func.func @transform_6(%arg0: i32) -> (i32, i32) {
    %c0_i32 = arith.constant 0 : i32
    %c0_i32_0 = arith.constant 0 : i32
    %c0_i32_1 = arith.constant 0 : i32
    return %c0_i32, %c0_i32_0 : i32, i32
  }
  func.func @transform_7(%arg0: i32) -> (i32, i32) {
    %c0_i32 = arith.constant 0 : i32
    %c0_i32_0 = arith.constant 0 : i32
    %c0_i32_1 = arith.constant 0 : i32
    return %c0_i32, %c0_i32_0 : i32, i32
  }
  func.func @transform_8(%arg0: i32) -> (i32, i32) {
    %c0_i32 = arith.constant 0 : i32
    %c0_i32_0 = arith.constant 0 : i32
    %c0_i32_1 = arith.constant 0 : i32
    return %c0_i32, %c0_i32_0 : i32, i32
  }
  func.func @transform_9(%arg0: i32) -> (i32, i32) {
    %c0_i32 = arith.constant 0 : i32
    %c0_i32_0 = arith.constant 0 : i32
    %c0_i32_1 = arith.constant 0 : i32
    return %c0_i32, %c0_i32_0 : i32, i32
  }
  func.func @transform_10(%arg0: i32) -> (i32, i32) {
    %c0_i32 = arith.constant 0 : i32
    %c0_i32_0 = arith.constant 0 : i32
    %c0_i32_1 = arith.constant 0 : i32
    return %c0_i32, %c0_i32_0 : i32, i32
  }
  func.func @transform_11(%arg0: i32) -> (i32, i32) {
    %c0_i32 = arith.constant 0 : i32
    %c0_i32_0 = arith.constant 0 : i32
    %c0_i32_1 = arith.constant 0 : i32
    return %c0_i32, %c0_i32_0 : i32, i32
  }
  func.func @transform_12(%arg0: i32) -> (i32, i32) {
    %c0_i32 = arith.constant 0 : i32
    %c0_i32_0 = arith.constant 0 : i32
    %c0_i32_1 = arith.constant 0 : i32
    return %c0_i32, %c0_i32_0 : i32, i32
  }
  func.func @transform_13(%arg0: i32) -> (i32, i32) {
    %c0_i32 = arith.constant 0 : i32
    %c0_i32_0 = arith.constant 0 : i32
    %c0_i32_1 = arith.constant 0 : i32
    return %c0_i32, %c0_i32_0 : i32, i32
  }
  func.func @transform_14(%arg0: i32) -> (i32, i32) {
    %c0_i32 = arith.constant 0 : i32
    %c0_i32_0 = arith.constant 0 : i32
    %c0_i32_1 = arith.constant 0 : i32
    return %c0_i32, %c0_i32_0 : i32, i32
  }
  func.func @transform_15(%arg0: i32) -> (i32, i32) {
    %c0_i32 = arith.constant 0 : i32
    %c0_i32_0 = arith.constant 0 : i32
    return %c0_i32, %arg0 : i32, i32
  }
  func.func @transform_16(%arg0: i32) -> (i32, i32) {
    %c0_i32 = arith.constant 0 : i32
    %c0_i32_0 = arith.constant 0 : i32
    return %c0_i32, %arg0 : i32, i32
  }
  func.func @transform_17(%arg0: i32) -> (i32, i32) {
    %c0_i32 = arith.constant 0 : i32
    %c0_i32_0 = arith.constant 0 : i32
    return %c0_i32, %arg0 : i32, i32
  }
  func.func @transform_18(%arg0: i32) -> (i32, i32) {
    %c0_i32 = arith.constant 0 : i32
    %c0_i32_0 = arith.constant 0 : i32
    %c0_i32_1 = arith.constant 0 : i32
    return %c0_i32, %c0_i32_0 : i32, i32
  }
  func.func @transform_19(%arg0: i32) -> (i32, i32) {
    %c0_i32 = arith.constant 0 : i32
    %c0_i32_0 = arith.constant 0 : i32
    %c0_i32_1 = arith.constant 0 : i32
    return %c0_i32, %c0_i32_0 : i32, i32
  }
}

</mosaic_0001>

<llo_original>
// kernel: tpu_custom_call.1
$region0: #{tpu_custom_call.1}
  #allocation0 [shape = 'u32[]', space=smem, size = 0x4, offset = 0x4, fixed_abs, tag = 'smem constant byte address 0x4 - core index']
  #allocation1 [shape = 'u32[144,128]{1,0:T(1,128)}', space=vmem, size = 0x12000, scoped, tag = 'internal scratch']
  #allocation2 [shape = 'bf16[8,80]{1,0:T(8,128)(2,1)}', space=vmem, size = 0x800, scoped, tag = 'scratch operand']
  %s0 = inlined_call_operand.hbm [shape: f32[8,16], index: 0, kind: input, shape index: {}]
  %s1 = inlined_call_operand.hbm [shape: f32[8,32], index: 1, kind: input, shape index: {}]
  %s2 = inlined_call_operand.hbm [shape: bf16[8,8,32], index: 2, kind: input, shape index: {}]
  %s3 = inlined_call_operand.vmem [shape: f32[8,8,32], index: 3, kind: input, shape index: {}]
  %s4 = inlined_call_operand.hbm [shape: f32[8,8], index: 4, kind: input, shape index: {}]
  %s5 = inlined_call_operand.vmem [shape: bf16[32,32], index: 5, kind: input, shape index: {}]
  %s6 = inlined_call_operand.vmem [shape: f32[1,32], index: 6, kind: input, shape index: {}]
  %s7 = inlined_call_operand.vmem [shape: bf16[48,32], index: 7, kind: input, shape index: {}]
  %s8 = inlined_call_operand.vmem [shape: bf16[48,32], index: 8, kind: input, shape index: {}]
  %s9 = inlined_call_operand.vmem [shape: bf16[48,32], index: 9, kind: input, shape index: {}]
  %s10 = inlined_call_operand.vmem [shape: bf16[32,32], index: 10, kind: input, shape index: {}]
  %s11 = inlined_call_operand.vmem [shape: bf16[32,32], index: 11, kind: input, shape index: {}]
  %s12 = inlined_call_operand.hbm [shape: bf16[32,32], index: 12, kind: input, shape index: {}]
  %s13 = inlined_call_operand.vmem [shape: f32[3,32], index: 13, kind: input, shape index: {}]
  %s14 = inlined_call_operand.vmem [shape: f32[3,32], index: 14, kind: input, shape index: {}]
  %s15 = inlined_call_operand.vmem [shape: bf16[80,128], index: 15, kind: input, shape index: {}]
  %s16 = inlined_call_operand.vmem [shape: f32[1,128], index: 16, kind: input, shape index: {}]
  %s17 = inlined_call_operand.hbm [shape: f32[8,128], index: 17, kind: output, shape index: {0}]
  %s18 = inlined_call_operand.hbm [shape: f32[8,32], index: 18, kind: output, shape index: {1}]
  %s19 = inlined_call_operand.hbm [shape: f32[8,8], index: 19, kind: output, shape index: {2}]
  %20 = xla_tuple %s17, %s18, %s19
  %s21 = sld [smem:[#allocation0]]
  $region118: #{tpu_custom_call.1} parent=0
    _
  %s23 = ssub.s32 1, %s21
  %s24 = scalar_select 0, %s23, %s21
  $region1: #{tpu_custom_call.1} parent=0
    #allocation3 [shape = 'u8[4096]{0}', space=vmem, size = 0x1000, scoped, tag = 'input window, operand 0, single buffered']
    #allocation4 [shape = 's32[1]{0}', space=sflag, size = 0x4, scoped, tag = 'scoped memory for tpu_custom_call.1']
    #allocation5 [shape = 's32[1]{0}', space=sflag, size = 0x4, scoped, tag = 'scoped memory for tpu_custom_call.1']
    #allocation6 [shape = 'u8[4096]{0}', space=vmem, size = 0x1000, scoped, tag = 'input window, operand 1, single buffered']
    #allocation7 [shape = 's32[1]{0}', space=sflag, size = 0x4, scoped, tag = 'scoped memory for tpu_custom_call.1']
    #allocation8 [shape = 'u8[16384]{0}', space=vmem, size = 0x4000, scoped, tag = 'input window, operand 2, single buffered']
    #allocation9 [shape = 'u8[4096]{0}', space=vmem, size = 0x1000, scoped, tag = 'input window, operand 4, single buffered']
    #allocation10 [shape = 's32[1]{0}', space=sflag, size = 0x4, scoped, tag = 'scoped memory for tpu_custom_call.1']
    #allocation11 [shape = 'u8[8192]{0}', space=vmem, size = 0x2000, scoped, tag = 'input window, operand 12, single buffered']
    #allocation12 [shape = 'u8[4096]{0}', space=vmem, size = 0x1000, scoped, tag = 'output window, operand 0, single buffered']
    #allocation13 [shape = 'u8[4096]{0}', space=vmem, size = 0x1000, scoped, tag = 'output window, operand 1, single buffered']
    #allocation14 [shape = 's32[1]{0}', space=sflag, size = 0x4, scoped, tag = 'scoped memory for tpu_custom_call.1']
    #allocation15 [shape = 'u8[4096]{0}', space=vmem, size = 0x1000, scoped, tag = 'output window, operand 2, single buffered']
    %25 = vsyncpa [#allocation4], 0
    %26 = vsyncpa [#allocation7], 0
    %27 = vsyncpa [#allocation10], 0
    %28 = vsyncpa [#allocation5], 0
    %29 = vsyncpa [#allocation14], 0
    // Predicated region
    $region2: #{tpu_custom_call.1} parent=1 // pred_check
      _
    $region3: #{tpu_custom_call.1} parent=1 // pred_check_branch
      %31 = sbr.rel (0) target = $region5
    $region4: #{tpu_custom_call.1} parent=1 // pred_region
      %s33 = ssub.s32 128, 128
      %34 = vsyncadd [#allocation4], %s33
      %s36 = sshll.u32 [#allocation3], 4
      %s37 = int_to_ptr.vmem [resolvable:$true] %s36
      %39 = dma.hbm_to_vmem [thread:$0]  %s0, 128, %s37, [#allocation4]
    $region5: #{tpu_custom_call.1} parent=1 // pred_fallthru
      _
    // Predicated region
    $region6: #{tpu_custom_call.1} parent=1 // pred_check
      _
    $region7: #{tpu_custom_call.1} parent=1 // pred_check_branch
      %41 = sbr.rel (0) target = $region9
    $region8: #{tpu_custom_call.1} parent=1 // pred_region
      %s43 = ssub.s32 128, 128
      %44 = vsyncadd [#allocation7], %s43
      %s46 = sshll.u32 [#allocation6], 4
      %s47 = int_to_ptr.vmem [resolvable:$true] %s46
      %49 = dma.hbm_to_vmem [thread:$0]  %s1, 128, %s47, [#allocation7]
    $region9: #{tpu_custom_call.1} parent=1 // pred_fallthru
      _
    // Predicated region
    $region10: #{tpu_custom_call.1} parent=1 // pred_check
      _
    $region11: #{tpu_custom_call.1} parent=1 // pred_check_branch
      %51 = sbr.rel (0) target = $region13
    $region12: #{tpu_custom_call.1} parent=1 // pred_region
      %s53 = ssub.s32 512, 512
      %54 = vsyncadd [#allocation7], %s53
      %s55 = sshll.u32 [#allocation8], 4
      %s56 = int_to_ptr.vmem [resolvable:$true] %s55
      %61 = dma.hbm_to_vmem [thread:$0]  %s2, 512, %s56, [#allocation7], 64, 64, 4
    $region13: #{tpu_custom_call.1} parent=1 // pred_fallthru
      _
    // Predicated region
    $region14: #{tpu_custom_call.1} parent=1 // pred_check
      _
    $region15: #{tpu_custom_call.1} parent=1 // pred_check_branch
      %63 = sbr.rel (0) target = $region17
    $region16: #{tpu_custom_call.1} parent=1 // pred_region
      _
    $region17: #{tpu_custom_call.1} parent=1 // pred_fallthru
      _
    // Predicated region
    $region18: #{tpu_custom_call.1} parent=1 // pred_check
      _
    $region19: #{tpu_custom_call.1} parent=1 // pred_check_branch
      %65 = sbr.rel (0) target = $region21
    $region20: #{tpu_custom_call.1} parent=1 // pred_region
      %s67 = ssub.s32 128, 128
      %68 = vsyncadd [#allocation10], %s67
      %s70 = sshll.u32 [#allocation9], 4
      %s71 = int_to_ptr.vmem [resolvable:$true] %s70
      %73 = dma.hbm_to_vmem [thread:$0]  %s4, 128, %s71, [#allocation10]
    $region21: #{tpu_custom_call.1} parent=1 // pred_fallthru
      _
    // Predicated region
    $region22: #{tpu_custom_call.1} parent=1 // pred_check
      _
    $region23: #{tpu_custom_call.1} parent=1 // pred_check_branch
      %75 = sbr.rel (0) target = $region25
    $region24: #{tpu_custom_call.1} parent=1 // pred_region
      _
    $region25: #{tpu_custom_call.1} parent=1 // pred_fallthru
      _
    // Predicated region
    $region26: #{tpu_custom_call.1} parent=1 // pred_check
      _
    $region27: #{tpu_custom_call.1} parent=1 // pred_check_branch
      %77 = sbr.rel (0) target = $region29
    $region28: #{tpu_custom_call.1} parent=1 // pred_region
      _
    $region29: #{tpu_custom_call.1} parent=1 // pred_fallthru
      _
    // Predicated region
    $region30: #{tpu_custom_call.1} parent=1 // pred_check
      _
    $region31: #{tpu_custom_call.1} parent=1 // pred_check_branch
      %79 = sbr.rel (0) target = $region33
    $region32: #{tpu_custom_call.1} parent=1 // pred_region
      _
    $region33: #{tpu_custom_call.1} parent=1 // pred_fallthru
      _
    // Predicated region
    $region34: #{tpu_custom_call.1} parent=1 // pred_check
      _
    $region35: #{tpu_custom_call.1} parent=1 // pred_check_branch
      %81 = sbr.rel (0) target = $region37
    $region36: #{tpu_custom_call.1} parent=1 // pred_region
      _
    $region37: #{tpu_custom_call.1} parent=1 // pred_fallthru
      _
    // Predicated region
    $region38: #{tpu_custom_call.1} parent=1 // pred_check
      _
    $region39: #{tpu_custom_call.1} parent=1 // pred_check_branch
      %83 = sbr.rel (0) target = $region41
    $region40: #{tpu_custom_call.1} parent=1 // pred_region
      _
    $region41: #{tpu_custom_call.1} parent=1 // pred_fallthru
      _
    // Predicated region
    $region42: #{tpu_custom_call.1} parent=1 // pred_check
      _
    $region43: #{tpu_custom_call.1} parent=1 // pred_check_branch
      %85 = sbr.rel (0) target = $region45
    $region44: #{tpu_custom_call.1} parent=1 // pred_region
      _
    $region45: #{tpu_custom_call.1} parent=1 // pred_fallthru
      _
    // Predicated region
    $region46: #{tpu_custom_call.1} parent=1 // pred_check
      _
    $region47: #{tpu_custom_call.1} parent=1 // pred_check_branch
      %87 = sbr.rel (0) target = $region49
    $region48: #{tpu_custom_call.1} parent=1 // pred_region
      _
    $region49: #{tpu_custom_call.1} parent=1 // pred_fallthru
      _
    // Predicated region
    $region50: #{tpu_custom_call.1} parent=1 // pred_check
      _
    $region51: #{tpu_custom_call.1} parent=1 // pred_check_branch
      %89 = sbr.rel (0) target = $region53
    $region52: #{tpu_custom_call.1} parent=1 // pred_region
      %s91 = ssub.s32 256, 256
      %92 = vsyncadd [#allocation10], %s91
      %s93 = sshll.u32 [#allocation11], 4
      %s94 = int_to_ptr.vmem [resolvable:$true] %s93
      %99 = dma.hbm_to_vmem [thread:$0]  %s12, 256, %s94, [#allocation10], 64, 64, 4
    $region53: #{tpu_custom_call.1} parent=1 // pred_fallthru
      _
    // Predicated region
    $region54: #{tpu_custom_call.1} parent=1 // pred_check
      _
    $region55: #{tpu_custom_call.1} parent=1 // pred_check_branch
      %101 = sbr.rel (0) target = $region57
    $region56: #{tpu_custom_call.1} parent=1 // pred_region
      _
    $region57: #{tpu_custom_call.1} parent=1 // pred_fallthru
      _
    // Predicated region
    $region58: #{tpu_custom_call.1} parent=1 // pred_check
      _
    $region59: #{tpu_custom_call.1} parent=1 // pred_check_branch
      %103 = sbr.rel (0) target = $region61
    $region60: #{tpu_custom_call.1} parent=1 // pred_region
      _
    $region61: #{tpu_custom_call.1} parent=1 // pred_fallthru
      _
    // Predicated region
    $region62: #{tpu_custom_call.1} parent=1 // pred_check
      _
    $region63: #{tpu_custom_call.1} parent=1 // pred_check_branch
      %105 = sbr.rel (0) target = $region65
    $region64: #{tpu_custom_call.1} parent=1 // pred_region
      _
    $region65: #{tpu_custom_call.1} parent=1 // pred_fallthru
      _
    // Predicated region
    $region66: #{tpu_custom_call.1} parent=1 // pred_check
      _
    $region67: #{tpu_custom_call.1} parent=1 // pred_check_branch
      %107 = sbr.rel (0) target = $region69
    $region68: #{tpu_custom_call.1} parent=1 // pred_region
      _
    $region69: #{tpu_custom_call.1} parent=1 // pred_fallthru
      _
    // Predicated region
    $region70: #{tpu_custom_call.1} parent=1 // pred_check
      _
    $region71: #{tpu_custom_call.1} parent=1 // pred_check_branch
      %109 = sbr.rel (0) target = $region73
    $region72: #{tpu_custom_call.1} parent=1 // pred_region
      %110 = dma.done [#allocation4], 128
    $region73: #{tpu_custom_call.1} parent=1 // pred_fallthru
      _
    // Predicated region
    $region74: #{tpu_custom_call.1} parent=1 // pred_check
      _
    $region75: #{tpu_custom_call.1} parent=1 // pred_check_branch
      %112 = sbr.rel (0) target = $region77
    $region76: #{tpu_custom_call.1} parent=1 // pred_region
      %113 = dma.done [#allocation7], 128
    $region77: #{tpu_custom_call.1} parent=1 // pred_fallthru
      _
    // Predicated region
    $region78: #{tpu_custom_call.1} parent=1 // pred_check
      _
    $region79: #{tpu_custom_call.1} parent=1 // pred_check_branch
      %115 = sbr.rel (0) target = $region81
    $region80: #{tpu_custom_call.1} parent=1 // pred_region
      %116 = dma.done [#allocation7], 512
    $region81: #{tpu_custom_call.1} parent=1 // pred_fallthru
      _
    // Predicated region
    $region82: #{tpu_custom_call.1} parent=1 // pred_check
      _
    $region83: #{tpu_custom_call.1} parent=1 // pred_check_branch
      %118 = sbr.rel (0) target = $region85
    $region84: #{tpu_custom_call.1} parent=1 // pred_region
      %119 = dma.done [#allocation10], 128
    $region85: #{tpu_custom_call.1} parent=1 // pred_fallthru
      _
    // Predicated region
    $region86: #{tpu_custom_call.1} parent=1 // pred_check
      _
    $region87: #{tpu_custom_call.1} parent=1 // pred_check_branch
      %121 = sbr.rel (0) target = $region89
    $region88: #{tpu_custom_call.1} parent=1 // pred_region
      %122 = dma.done [#allocation10], 256
    $region89: #{tpu_custom_call.1} parent=1 // pred_fallthru
      _
    %p124 = scmp.eq.s32.totalorder 0, 0
    // Predicated region
    $region90: #{tpu_custom_call.1} parent=1 // pred_check
      %p125 = pneg %p124
    $region91: #{tpu_custom_call.1} parent=1 // pred_check_branch
      %127 = sbr.rel (%p125) target = $region93
    $region92: #{tpu_custom_call.1} parent=1 // pred_region
      %v128 = vld [vmem:[#allocation6] sm:$0xff]
      %v129 = vpack.c.bf16 %v128, %v128
      %v130 = vld [vmem:[#allocation3] sm:$0xff]
      %v131 = vld [vmem:[#allocation8] sm:$0xf]
      %v132 = vld [vmem:[#allocation8 + $0x4] sm:$0xf]
      %v133 = vld [vmem:[#allocation8 + $0x8] sm:$0xf]
      %v134 = vld [vmem:[#allocation8 + $0xc] sm:$0xf]
      %v135 = vld [vmem:[#allocation8 + $0x10] sm:$0xf]
      %v136 = vld [vmem:[#allocation8 + $0x14] sm:$0xf]
      %v137 = vld [vmem:[#allocation8 + $0x18] sm:$0xf]
      %v138 = vld [vmem:[#allocation8 + $0x1c] sm:$0xf]
      %v139 = vld [vmem:[#allocation9] sm:$0xff]
      %v140 = vld [vmem:[%s5] sm:$0xf]
      %v141 = vld [vmem:[%s5 + $0x4] sm:$0xf]
      %v142 = vld [vmem:[%s5 + $0x8] sm:$0xf]
      %v143 = vld [vmem:[%s5 + $0xc] sm:$0xf]
      %v148 = vunpack.c.l.b16 %v140
      %v149 = vunpack.c.l.b16 %v141
      %v150 = vunpack.c.l.b16 %v142
      %v151 = vunpack.c.l.b16 %v143
      %v152 = vpack.c.b16 %v149, %v148
      %v153 = vpack.c.b16 %v151, %v150
      %vm156 = vcmask 261120
      %v158 = vsel %vm156, %v129, 0
      %160 = vmatprep.subr.bf16.mxu0 0
      %161 = vmatpush1.bf16.msra.mxu0 %v152
      %162 = vmatprep.subr.bf16.mxu0 0
      %163 = vmatpush1.bf16.msra.mxu0 %v153
      %164 = vmatprep.subr.bf16.mxu0 0
      %165 = vmatpush1.bf16.msra.mxu0 0
      %166 = vmatprep.subr.bf16.mxu0 0
      %167 = vmatpush1.bf16.msra.mxu0 0
      %168 = vmatprep.subr.bf16.mxu0 0
      %169 = vmatpush1.bf16.msra.mxu0 0
      %170 = vmatprep.subr.bf16.mxu0 0
      %171 = vmatpush1.bf16.msra.mxu0 0
      %172 = vmatprep.subr.bf16.mxu0 0
      %173 = vmatpush1.bf16.msra.mxu0 0
      %174 = vmatprep.subr.bf16.mxu0 0
      %175 = vmatpush1.bf16.msra.mxu0 0
      %176 = vmatprep.subr.bf16.mxu0 0
      %177 = vmatpush1.bf16.msra.mxu0 0
      %178 = vmatprep.subr.bf16.mxu0 0
      %179 = vmatpush1.bf16.msra.mxu0 0
      %180 = vmatprep.subr.bf16.mxu0 0
      %181 = vmatpush1.bf16.msra.mxu0 0
      %182 = vmatprep.subr.bf16.mxu0 0
      %183 = vmatpush1.bf16.msra.mxu0 0
      %184 = vmatprep.subr.bf16.mxu0 0
      %185 = vmatpush1.bf16.msra.mxu0 0
      %186 = vmatprep.subr.bf16.mxu0 0
      %187 = vmatpush1.bf16.msra.mxu0 0
      %188 = vmatprep.subr.bf16.mxu0 0
      %189 = vmatpush1.bf16.msra.mxu0 0
      %190 = vmatprep.subr.bf16.mxu0 0
      %191 = vmatpush1.bf16.msra.mxu0 0
      %192 = vmatprep.mubr.bf16.mxu0 0
      %193 = vmatmul.mubr.bf16.gmra.mrb[0].mxu0 %v158
      %v194 = vpop.f32.mrb[0].mxu0
      %v195 = vadd.f32 0.0, %v194
      %v196 = vpop.f32.mrb[0].mxu0
      %v197 = vpop.f32.mrb[0].mxu0
      %v198 = vpop.f32.mrb[0].mxu0
      %199 = vdwg.mxu0
      %v201 = vcombine.high %v195, %v195
      %v203 = vunpack.c.l.s4 1966171168
      %v204 = vunpack.c.0.s8 %v203
      %v205 = vlaneseq
      %v206 = vshrl.u32 %v205, 7
      %v207 = vsub.s32 %v204, %v206
      %v208 = vrot.slane %v195, %v207
      %v210 = vunpack.c.l.s4 1966171168
      %v211 = vunpack.c.0.s8 %v210
      %v212 = vlaneseq
      %v213 = vshrl.u32 %v212, 7
      %v214 = vsub.s32 %v211, %v213
      %v215 = vrot.slane %v201, %v214
      %v216 = vcombine.high %v208, %v208
      %v217 = vcombine.high %v215, %v215
      %v219 = vunpack.c.l.s4 1966171168
      %v220 = vunpack.c.0.s8 %v219
      %v221 = vlaneseq
      %v222 = vshrl.u32 %v221, 7
      %v223 = vsub.s32 %v220, %v222
      %v224 = vrot.slane %v208, %v223
      %v226 = vunpack.c.l.s4 1966171168
      %v227 = vunpack.c.0.s8 %v226
      %v228 = vlaneseq
      %v229 = vshrl.u32 %v228, 7
      %v230 = vsub.s32 %v227, %v229
      %v231 = vrot.slane %v215, %v230
      %v233 = vunpack.c.l.s4 1966171168
      %v234 = vunpack.c.0.s8 %v233
      %v235 = vlaneseq
      %v236 = vshrl.u32 %v235, 7
      %v237 = vsub.s32 %v234, %v236
      %v238 = vrot.slane %v216, %v237
      %v240 = vunpack.c.l.s4 1966171168
      %v241 = vunpack.c.0.s8 %v240
      %v242 = vlaneseq
      %v243 = vshrl.u32 %v242, 7
      %v244 = vsub.s32 %v241, %v243
      %v245 = vrot.slane %v217, %v244
      %v246 = vcombine.high %v224, %v224
      %v247 = vcombine.high %v231, %v231
      %v248 = vcombine.high %v238, %v238
      %v249 = vcombine.high %v245, %v245
      %v250 = vld [vmem:[%s3] sm:$0xff]
      %v251 = vld [vmem:[%s3 + $0x8] sm:$0xff]
      %v252 = vld [vmem:[%s3 + $0x10] sm:$0xff]
      %v253 = vld [vmem:[%s3 + $0x18] sm:$0xff]
      %v254 = vld [vmem:[%s3 + $0x20] sm:$0xff]
      %v255 = vld [vmem:[%s3 + $0x28] sm:$0xff]
      %v256 = vld [vmem:[%s3 + $0x30] sm:$0xff]
      %v257 = vld [vmem:[%s3 + $0x38] sm:$0xff]
      %v258 = vlaneseq
      %v259 = vshrl.u32 %v258, 7
      %v260 = vsub.s32 0, %v259
      %v261 = vrot.slane %v224, %v260
      %v262 = vlaneseq
      %v263 = vshrl.u32 %v262, 7
      %v264 = vsub.s32 0, %v263
      %v265 = vrot.slane %v238, %v264
      %v266 = vlaneseq
      %v267 = vshrl.u32 %v266, 7
      %v268 = vsub.s32 0, %v267
      %v269 = vrot.slane %v246, %v268
      %v270 = vlaneseq
      %v271 = vshrl.u32 %v270, 7
      %v272 = vsub.s32 0, %v271
      %v273 = vrot.slane %v248, %v272
      %v274 = vlaneseq
      %v275 = vshrl.u32 %v274, 7
      %v276 = vsub.s32 0, %v275
      %v277 = vrot.slane %v231, %v276
      %v278 = vlaneseq
      %v279 = vshrl.u32 %v278, 7
      %v280 = vsub.s32 0, %v279
      %v281 = vrot.slane %v245, %v280
      %v282 = vlaneseq
      %v283 = vshrl.u32 %v282, 7
      %v284 = vsub.s32 0, %v283
      %v285 = vrot.slane %v247, %v284
      %v286 = vlaneseq
      %v287 = vshrl.u32 %v286, 7
      %v288 = vsub.s32 0, %v287
      %v289 = vrot.slane %v249, %v288
      %v298 = vadd.f32 %v261, %v250
      %v299 = vadd.f32 %v265, %v251
      %v300 = vadd.f32 %v269, %v252
      %v301 = vadd.f32 %v273, %v253
      %v302 = vadd.f32 %v277, %v254
      %v303 = vadd.f32 %v281, %v255
      %v304 = vadd.f32 %v285, %v256
      %v305 = vadd.f32 %v289, %v257
      %v306 = vtanh.pop %v298
      %v307 = vtanh.pop %v299
      %v308 = vtanh.pop %v300
      %v309 = vtanh.pop %v301
      %v310 = vtanh.pop %v302
      %v311 = vtanh.pop %v303
      %v312 = vtanh.pop %v304
      %v313 = vtanh.pop %v305
      %v314 = vld [vmem:[%s6] sm:$0x1]
      %v316 = vlaneseq
      %v317 = vshrl.u32 %v316, 7
      %v318 = vsub.s32 0, %v317
      %v319 = vrot.slane %v314, %v318
      %v321 = vmul.f32 %v306, %v319
      %v322 = vmul.f32 %v307, %v319
      %v323 = vmul.f32 %v308, %v319
      %v324 = vmul.f32 %v309, %v319
      %v325 = vmul.f32 %v310, %v319
      %v326 = vmul.f32 %v311, %v319
      %v327 = vmul.f32 %v312, %v319
      %v328 = vmul.f32 %v313, %v319
      %v329 = vsel %vm156, %v321, 0.0
      %330 = vadd.xlane.f32.xlu0 %v329
      %v331 = vpop.xlane.xlu0 %330
      %v332 = vsel %vm156, %v322, 0.0
      %333 = vadd.xlane.f32.xlu0 %v332
      %v334 = vpop.xlane.xlu0 %333
      %v335 = vsel %vm156, %v323, 0.0
      %336 = vadd.xlane.f32.xlu0 %v335
      %v337 = vpop.xlane.xlu0 %336
      %v338 = vsel %vm156, %v324, 0.0
      %339 = vadd.xlane.f32.xlu0 %v338
      %v340 = vpop.xlane.xlu0 %339
      %v341 = vsel %vm156, %v325, 0.0
      %342 = vadd.xlane.f32.xlu0 %v341
      %v343 = vpop.xlane.xlu0 %342
      %v344 = vsel %vm156, %v326, 0.0
      %345 = vadd.xlane.f32.xlu0 %v344
      %v346 = vpop.xlane.xlu0 %345
      %v347 = vsel %vm156, %v327, 0.0
      %348 = vadd.xlane.f32.xlu0 %v347
      %v349 = vpop.xlane.xlu0 %348
      %v350 = vsel %vm156, %v328, 0.0
      %351 = vadd.xlane.f32.xlu0 %v350
      %v352 = vpop.xlane.xlu0 %351
      %vm353 = vcmp.gt.f32.partialorder %v139, 0.0
      %v362 = vlaneseq
      %v363 = vand.u32 %v362, 127
      %v364 = vlaneseq
      %v365 = vshrl.u32 %v364, 7
      %v366 = vsub.s32 %v363, %v365
      %v367 = vrot.slane %v331, %v366
      %v368 = vlaneseq
      %v369 = vshrl.u32 %v368, 7
      %v370 = vsub.s32 %v363, %v369
      %v371 = vrot.slane %v334, %v370
      %v372 = vlaneseq
      %v373 = vshrl.u32 %v372, 7
      %v374 = vsub.s32 %v363, %v373
      %v375 = vrot.slane %v337, %v374
      %v376 = vlaneseq
      %v377 = vshrl.u32 %v376, 7
      %v378 = vsub.s32 %v363, %v377
      %v379 = vrot.slane %v340, %v378
      %v380 = vlaneseq
      %v381 = vshrl.u32 %v380, 7
      %v382 = vsub.s32 %v363, %v381
      %v383 = vrot.slane %v343, %v382
      %v384 = vlaneseq
      %v385 = vshrl.u32 %v384, 7
      %v386 = vsub.s32 %v363, %v385
      %v387 = vrot.slane %v346, %v386
      %v388 = vlaneseq
      %v389 = vshrl.u32 %v388, 7
      %v390 = vsub.s32 %v363, %v389
      %v391 = vrot.slane %v349, %v390
      %v392 = vlaneseq
      %v393 = vshrl.u32 %v392, 7
      %v394 = vsub.s32 %v363, %v393
      %v395 = vrot.slane %v352, %v394
      %vm396 = vcmask 1041409
      %v397 = vsel %vm396, %v371, %v367
      %vm398 = vcmask 1042434
      %v399 = vsel %vm398, %v375, %v397
      %vm400 = vcmask 1043459
      %v401 = vsel %vm400, %v379, %v399
      %vm402 = vcmask 1044484
      %v403 = vsel %vm402, %v383, %v401
      %vm404 = vcmask 1045509
      %v405 = vsel %vm404, %v387, %v403
      %vm406 = vcmask 1046534
      %v407 = vsel %vm406, %v391, %v405
      %vm408 = vcmask 1047559
      %v409 = vsel %vm408, %v395, %v407
      %v411 = vsel %vm353, %v409, -1e+10
      %vm412 = vcmask 64512
      %v413 = vsel %vm412, %v411, -inf
      %414 = vmax.xlane.f32.xlu0 %v413
      %v415 = vpop.xlane.xlu0 %414
      %v416 = vsub.f32 %v411, %v415
      %v417 = vmul.f32 %v416, 1.442695
      %v418 = vpow.pop %v417
      %v419 = vsel %vm412, %v418, 0.0
      %420 = vadd.xlane.f32.xlu0 %v419
      %v421 = vpop.xlane.xlu0 %420
      %v422 = vrcp.pop %v421
      %v423 = vmul.f32 %v418, %v422
      %424 = vst.msk [vmem:[#allocation15] sm:$0xff] %vm412, %v423
      %v425 = vpack.c.bf16 %v423, %v423
      %v428 = vunpack.c.l.s4 1966171168
      %v429 = vunpack.c.0.s8 %v428
      %v430 = vlaneseq
      %v431 = vshrl.u32 %v430, 7
      %v432 = vsub.s32 %v429, %v431
      %v433 = vrot.slane %v425, %v432
      %v434 = vcombine.high %v433, %v433
      %v436 = vunpack.c.l.s4 1966171168
      %v437 = vunpack.c.0.s8 %v436
      %v438 = vlaneseq
      %v439 = vshrl.u32 %v438, 7
      %v440 = vsub.s32 %v437, %v439
      %v441 = vrot.slane %v433, %v440
      %v443 = vunpack.c.l.s4 1966171168
      %v444 = vunpack.c.0.s8 %v443
      %v445 = vlaneseq
      %v446 = vshrl.u32 %v445, 7
      %v447 = vsub.s32 %v444, %v446
      %v448 = vrot.slane %v434, %v447
      %v449 = vcombine.high %v441, %v441
      %v450 = vcombine.high %v448, %v448
      %v451 = vunpack.i.l.s16 %v441
      %v452 = vunpack.i.h.s16 %v441
      %v453 = vunpack.i.l.s16 %v448
      %v454 = vunpack.i.h.s16 %v448
      %v455 = vunpack.i.l.s16 %v449
      %v456 = vunpack.i.h.s16 %v449
      %v457 = vunpack.i.l.s16 %v450
      %v458 = vunpack.i.h.s16 %v450
      %v459 = vpack.i.b16 %v451, %v451
      %v460 = vlaneseq
      %v461 = vshrl.u32 %v460, 7
      %v462 = vsub.s32 0, %v461
      %v463 = vrot.slane %v459, %v462
      %v465 = vsel %vm412, %v463, 0
      %vm467 = vcmask 1043456
      %v469 = vsel %vm467, %v131, 0
      %471 = vmatprep.subr.bf16.mxu0 0
      %472 = vmatpush1.bf16.msra.mxu0 %v469
      %473 = vmatprep.subr.bf16.mxu0 0
      %474 = vmatpush1.bf16.msra.mxu0 0
      %475 = vmatprep.subr.bf16.mxu0 0
      %476 = vmatpush1.bf16.msra.mxu0 0
      %477 = vmatprep.subr.bf16.mxu0 0
      %478 = vmatpush1.bf16.msra.mxu0 0
      %479 = vmatprep.subr.bf16.mxu0 0
      %480 = vmatpush1.bf16.msra.mxu0 0
      %481 = vmatprep.subr.bf16.mxu0 0
      %482 = vmatpush1.bf16.msra.mxu0 0
      %483 = vmatprep.subr.bf16.mxu0 0
      %484 = vmatpush1.bf16.msra.mxu0 0
      %485 = vmatprep.subr.bf16.mxu0 0
      %486 = vmatpush1.bf16.msra.mxu0 0
      %487 = vmatprep.subr.bf16.mxu0 0
      %488 = vmatpush1.bf16.msra.mxu0 0
      %489 = vmatprep.subr.bf16.mxu0 0
      %490 = vmatpush1.bf16.msra.mxu0 0
      %491 = vmatprep.subr.bf16.mxu0 0
      %492 = vmatpush1.bf16.msra.mxu0 0
      %493 = vmatprep.subr.bf16.mxu0 0
      %494 = vmatpush1.bf16.msra.mxu0 0
      %495 = vmatprep.subr.bf16.mxu0 0
      %496 = vmatpush1.bf16.msra.mxu0 0
      %497 = vmatprep.subr.bf16.mxu0 0
      %498 = vmatpush1.bf16.msra.mxu0 0
      %499 = vmatprep.subr.bf16.mxu0 0
      %500 = vmatpush1.bf16.msra.mxu0 0
      %501 = vmatprep.subr.bf16.mxu0 0
      %502 = vmatpush1.bf16.msra.mxu0 0
      %503 = vmatprep.mubr.bf16.mxu0 0
      %504 = vmatmul.mubr.bf16.gmra.mrb[0].mxu0 %v465
      %v505 = vpop.f32.mrb[0].mxu0
      %v506 = vadd.f32 0.0, %v505
      %v507 = vpop.f32.mrb[0].mxu0
      %v508 = vpop.f32.mrb[0].mxu0
      %v509 = vpop.f32.mrb[0].mxu0
      %510 = vdwg.mxu0
      %v511 = vpack.i.b16 %v452, %v452
      %v512 = vlaneseq
      %v513 = vshrl.u32 %v512, 7
      %v514 = vsub.s32 0, %v513
      %v515 = vrot.slane %v511, %v514
      %v517 = vsel %vm412, %v515, 0
      %v520 = vsel %vm467, %v132, 0
      %522 = vmatprep.subr.bf16.mxu0 0
      %523 = vmatpush1.bf16.msra.mxu0 %v520
      %524 = vmatprep.subr.bf16.mxu0 0
      %525 = vmatpush1.bf16.msra.mxu0 0
      %526 = vmatprep.subr.bf16.mxu0 0
      %527 = vmatpush1.bf16.msra.mxu0 0
      %528 = vmatprep.subr.bf16.mxu0 0
      %529 = vmatpush1.bf16.msra.mxu0 0
      %530 = vmatprep.subr.bf16.mxu0 0
      %531 = vmatpush1.bf16.msra.mxu0 0
      %532 = vmatprep.subr.bf16.mxu0 0
      %533 = vmatpush1.bf16.msra.mxu0 0
      %534 = vmatprep.subr.bf16.mxu0 0
      %535 = vmatpush1.bf16.msra.mxu0 0
      %536 = vmatprep.subr.bf16.mxu0 0
      %537 = vmatpush1.bf16.msra.mxu0 0
      %538 = vmatprep.subr.bf16.mxu0 0
      %539 = vmatpush1.bf16.msra.mxu0 0
      %540 = vmatprep.subr.bf16.mxu0 0
      %541 = vmatpush1.bf16.msra.mxu0 0
      %542 = vmatprep.subr.bf16.mxu0 0
      %543 = vmatpush1.bf16.msra.mxu0 0
      %544 = vmatprep.subr.bf16.mxu0 0
      %545 = vmatpush1.bf16.msra.mxu0 0
      %546 = vmatprep.subr.bf16.mxu0 0
      %547 = vmatpush1.bf16.msra.mxu0 0
      %548 = vmatprep.subr.bf16.mxu0 0
      %549 = vmatpush1.bf16.msra.mxu0 0
      %550 = vmatprep.subr.bf16.mxu0 0
      %551 = vmatpush1.bf16.msra.mxu0 0
      %552 = vmatprep.subr.bf16.mxu0 0
      %553 = vmatpush1.bf16.msra.mxu0 0
      %554 = vmatprep.mubr.bf16.mxu0 0
      %555 = vmatmul.mubr.bf16.gmra.mrb[0].mxu0 %v517
      %v556 = vpop.f32.mrb[0].mxu0
      %v557 = vadd.f32 0.0, %v556
      %v558 = vpop.f32.mrb[0].mxu0
      %v559 = vpop.f32.mrb[0].mxu0
      %v560 = vpop.f32.mrb[0].mxu0
      %561 = vdwg.mxu0
      %v562 = vpack.i.b16 %v453, %v453
      %v563 = vlaneseq
      %v564 = vshrl.u32 %v563, 7
      %v565 = vsub.s32 0, %v564
      %v566 = vrot.slane %v562, %v565
      %v568 = vsel %vm412, %v566, 0
      %v571 = vsel %vm467, %v133, 0
      %573 = vmatprep.subr.bf16.mxu0 0
      %574 = vmatpush1.bf16.msra.mxu0 %v571
      %575 = vmatprep.subr.bf16.mxu0 0
      %576 = vmatpush1.bf16.msra.mxu0 0
      %577 = vmatprep.subr.bf16.mxu0 0
      %578 = vmatpush1.bf16.msra.mxu0 0
      %579 = vmatprep.subr.bf16.mxu0 0
      %580 = vmatpush1.bf16.msra.mxu0 0
      %581 = vmatprep.subr.bf16.mxu0 0
      %582 = vmatpush1.bf16.msra.mxu0 0
      %583 = vmatprep.subr.bf16.mxu0 0
      %584 = vmatpush1.bf16.msra.mxu0 0
      %585 = vmatprep.subr.bf16.mxu0 0
      %586 = vmatpush1.bf16.msra.mxu0 0
      %587 = vmatprep.subr.bf16.mxu0 0
      %588 = vmatpush1.bf16.msra.mxu0 0
      %589 = vmatprep.subr.bf16.mxu0 0
      %590 = vmatpush1.bf16.msra.mxu0 0
      %591 = vmatprep.subr.bf16.mxu0 0
      %592 = vmatpush1.bf16.msra.mxu0 0
      %593 = vmatprep.subr.bf16.mxu0 0
      %594 = vmatpush1.bf16.msra.mxu0 0
      %595 = vmatprep.subr.bf16.mxu0 0
      %596 = vmatpush1.bf16.msra.mxu0 0
      %597 = vmatprep.subr.bf16.mxu0 0
      %598 = vmatpush1.bf16.msra.mxu0 0
      %599 = vmatprep.subr.bf16.mxu0 0
      %600 = vmatpush1.bf16.msra.mxu0 0
      %601 = vmatprep.subr.bf16.mxu0 0
      %602 = vmatpush1.bf16.msra.mxu0 0
      %603 = vmatprep.subr.bf16.mxu0 0
      %604 = vmatpush1.bf16.msra.mxu0 0
      %605 = vmatprep.mubr.bf16.mxu0 0
      %606 = vmatmul.mubr.bf16.gmra.mrb[0].mxu0 %v568
      %v607 = vpop.f32.mrb[0].mxu0
      %v608 = vadd.f32 0.0, %v607
      %v609 = vpop.f32.mrb[0].mxu0
      %v610 = vpop.f32.mrb[0].mxu0
      %v611 = vpop.f32.mrb[0].mxu0
      %612 = vdwg.mxu0
      %v613 = vpack.i.b16 %v454, %v454
      %v614 = vlaneseq
      %v615 = vshrl.u32 %v614, 7
      %v616 = vsub.s32 0, %v615
      %v617 = vrot.slane %v613, %v616
      %v619 = vsel %vm412, %v617, 0
      %v622 = vsel %vm467, %v134, 0
      %624 = vmatprep.subr.bf16.mxu0 0
      %625 = vmatpush1.bf16.msra.mxu0 %v622
      %626 = vmatprep.subr.bf16.mxu0 0
      %627 = vmatpush1.bf16.msra.mxu0 0
      %628 = vmatprep.subr.bf16.mxu0 0
      %629 = vmatpush1.bf16.msra.mxu0 0
      %630 = vmatprep.subr.bf16.mxu0 0
      %631 = vmatpush1.bf16.msra.mxu0 0
      %632 = vmatprep.subr.bf16.mxu0 0
      %633 = vmatpush1.bf16.msra.mxu0 0
      %634 = vmatprep.subr.bf16.mxu0 0
      %635 = vmatpush1.bf16.msra.mxu0 0
      %636 = vmatprep.subr.bf16.mxu0 0
      %637 = vmatpush1.bf16.msra.mxu0 0
      %638 = vmatprep.subr.bf16.mxu0 0
      %639 = vmatpush1.bf16.msra.mxu0 0
      %640 = vmatprep.subr.bf16.mxu0 0
      %641 = vmatpush1.bf16.msra.mxu0 0
      %642 = vmatprep.subr.bf16.mxu0 0
      %643 = vmatpush1.bf16.msra.mxu0 0
      %644 = vmatprep.subr.bf16.mxu0 0
      %645 = vmatpush1.bf16.msra.mxu0 0
      %646 = vmatprep.subr.bf16.mxu0 0
      %647 = vmatpush1.bf16.msra.mxu0 0
      %648 = vmatprep.subr.bf16.mxu0 0
      %649 = vmatpush1.bf16.msra.mxu0 0
      %650 = vmatprep.subr.bf16.mxu0 0
      %651 = vmatpush1.bf16.msra.mxu0 0
      %652 = vmatprep.subr.bf16.mxu0 0
      %653 = vmatpush1.bf16.msra.mxu0 0
      %654 = vmatprep.subr.bf16.mxu0 0
      %655 = vmatpush1.bf16.msra.mxu0 0
      %656 = vmatprep.mubr.bf16.mxu0 0
      %657 = vmatmul.mubr.bf16.gmra.mrb[0].mxu0 %v619
      %v658 = vpop.f32.mrb[0].mxu0
      %v659 = vadd.f32 0.0, %v658
      %v660 = vpop.f32.mrb[0].mxu0
      %v661 = vpop.f32.mrb[0].mxu0
      %v662 = vpop.f32.mrb[0].mxu0
      %663 = vdwg.mxu0
      %v664 = vpack.i.b16 %v455, %v455
      %v665 = vlaneseq
      %v666 = vshrl.u32 %v665, 7
      %v667 = vsub.s32 0, %v666
      %v668 = vrot.slane %v664, %v667
      %v670 = vsel %vm412, %v668, 0
      %v673 = vsel %vm467, %v135, 0
      %675 = vmatprep.subr.bf16.mxu0 0
      %676 = vmatpush1.bf16.msra.mxu0 %v673
      %677 = vmatprep.subr.bf16.mxu0 0
      %678 = vmatpush1.bf16.msra.mxu0 0
      %679 = vmatprep.subr.bf16.mxu0 0
      %680 = vmatpush1.bf16.msra.mxu0 0
      %681 = vmatprep.subr.bf16.mxu0 0
      %682 = vmatpush1.bf16.msra.mxu0 0
      %683 = vmatprep.subr.bf16.mxu0 0
      %684 = vmatpush1.bf16.msra.mxu0 0
      %685 = vmatprep.subr.bf16.mxu0 0
      %686 = vmatpush1.bf16.msra.mxu0 0
      %687 = vmatprep.subr.bf16.mxu0 0
      %688 = vmatpush1.bf16.msra.mxu0 0
      %689 = vmatprep.subr.bf16.mxu0 0
      %690 = vmatpush1.bf16.msra.mxu0 0
      %691 = vmatprep.subr.bf16.mxu0 0
      %692 = vmatpush1.bf16.msra.mxu0 0
      %693 = vmatprep.subr.bf16.mxu0 0
      %694 = vmatpush1.bf16.msra.mxu0 0
      %695 = vmatprep.subr.bf16.mxu0 0
      %696 = vmatpush1.bf16.msra.mxu0 0
      %697 = vmatprep.subr.bf16.mxu0 0
      %698 = vmatpush1.bf16.msra.mxu0 0
      %699 = vmatprep.subr.bf16.mxu0 0
      %700 = vmatpush1.bf16.msra.mxu0 0
      %701 = vmatprep.subr.bf16.mxu0 0
      %702 = vmatpush1.bf16.msra.mxu0 0
      %703 = vmatprep.subr.bf16.mxu0 0
      %704 = vmatpush1.bf16.msra.mxu0 0
      %705 = vmatprep.subr.bf16.mxu0 0
      %706 = vmatpush1.bf16.msra.mxu0 0
      %707 = vmatprep.mubr.bf16.mxu0 0
      %708 = vmatmul.mubr.bf16.gmra.mrb[0].mxu0 %v670
      %v709 = vpop.f32.mrb[0].mxu0
      %v710 = vadd.f32 0.0, %v709
      %v711 = vpop.f32.mrb[0].mxu0
      %v712 = vpop.f32.mrb[0].mxu0
      %v713 = vpop.f32.mrb[0].mxu0
      %714 = vdwg.mxu0
      %v715 = vpack.i.b16 %v456, %v456
      %v716 = vlaneseq
      %v717 = vshrl.u32 %v716, 7
      %v718 = vsub.s32 0, %v717
      %v719 = vrot.slane %v715, %v718
      %v721 = vsel %vm412, %v719, 0
      %v724 = vsel %vm467, %v136, 0
      %726 = vmatprep.subr.bf16.mxu0 0
      %727 = vmatpush1.bf16.msra.mxu0 %v724
      %728 = vmatprep.subr.bf16.mxu0 0
      %729 = vmatpush1.bf16.msra.mxu0 0
      %730 = vmatprep.subr.bf16.mxu0 0
      %731 = vmatpush1.bf16.msra.mxu0 0
      %732 = vmatprep.subr.bf16.mxu0 0
      %733 = vmatpush1.bf16.msra.mxu0 0
      %734 = vmatprep.subr.bf16.mxu0 0
      %735 = vmatpush1.bf16.msra.mxu0 0
      %736 = vmatprep.subr.bf16.mxu0 0
      %737 = vmatpush1.bf16.msra.mxu0 0
      %738 = vmatprep.subr.bf16.mxu0 0
      %739 = vmatpush1.bf16.msra.mxu0 0
      %740 = vmatprep.subr.bf16.mxu0 0
      %741 = vmatpush1.bf16.msra.mxu0 0
      %742 = vmatprep.subr.bf16.mxu0 0
      %743 = vmatpush1.bf16.msra.mxu0 0
      %744 = vmatprep.subr.bf16.mxu0 0
      %745 = vmatpush1.bf16.msra.mxu0 0
      %746 = vmatprep.subr.bf16.mxu0 0
      %747 = vmatpush1.bf16.msra.mxu0 0
      %748 = vmatprep.subr.bf16.mxu0 0
      %749 = vmatpush1.bf16.msra.mxu0 0
      %750 = vmatprep.subr.bf16.mxu0 0
      %751 = vmatpush1.bf16.msra.mxu0 0
      %752 = vmatprep.subr.bf16.mxu0 0
      %753 = vmatpush1.bf16.msra.mxu0 0
      %754 = vmatprep.subr.bf16.mxu0 0
      %755 = vmatpush1.bf16.msra.mxu0 0
      %756 = vmatprep.subr.bf16.mxu0 0
      %757 = vmatpush1.bf16.msra.mxu0 0
      %758 = vmatprep.mubr.bf16.mxu0 0
      %759 = vmatmul.mubr.bf16.gmra.mrb[0].mxu0 %v721
      %v760 = vpop.f32.mrb[0].mxu0
      %v761 = vadd.f32 0.0, %v760
      %v762 = vpop.f32.mrb[0].mxu0
      %v763 = vpop.f32.mrb[0].mxu0
      %v764 = vpop.f32.mrb[0].mxu0
      %765 = vdwg.mxu0
      %v766 = vpack.i.b16 %v457, %v457
      %v767 = vlaneseq
      %v768 = vshrl.u32 %v767, 7
      %v769 = vsub.s32 0, %v768
      %v770 = vrot.slane %v766, %v769
      %v772 = vsel %vm412, %v770, 0
      %v775 = vsel %vm467, %v137, 0
      %777 = vmatprep.subr.bf16.mxu0 0
      %778 = vmatpush1.bf16.msra.mxu0 %v775
      %779 = vmatprep.subr.bf16.mxu0 0
      %780 = vmatpush1.bf16.msra.mxu0 0
      %781 = vmatprep.subr.bf16.mxu0 0
      %782 = vmatpush1.bf16.msra.mxu0 0
      %783 = vmatprep.subr.bf16.mxu0 0
      %784 = vmatpush1.bf16.msra.mxu0 0
      %785 = vmatprep.subr.bf16.mxu0 0
      %786 = vmatpush1.bf16.msra.mxu0 0
      %787 = vmatprep.subr.bf16.mxu0 0
      %788 = vmatpush1.bf16.msra.mxu0 0
      %789 = vmatprep.subr.bf16.mxu0 0
      %790 = vmatpush1.bf16.msra.mxu0 0
      %791 = vmatprep.subr.bf16.mxu0 0
      %792 = vmatpush1.bf16.msra.mxu0 0
      %793 = vmatprep.subr.bf16.mxu0 0
      %794 = vmatpush1.bf16.msra.mxu0 0
      %795 = vmatprep.subr.bf16.mxu0 0
      %796 = vmatpush1.bf16.msra.mxu0 0
      %797 = vmatprep.subr.bf16.mxu0 0
      %798 = vmatpush1.bf16.msra.mxu0 0
      %799 = vmatprep.subr.bf16.mxu0 0
      %800 = vmatpush1.bf16.msra.mxu0 0
      %801 = vmatprep.subr.bf16.mxu0 0
      %802 = vmatpush1.bf16.msra.mxu0 0
      %803 = vmatprep.subr.bf16.mxu0 0
      %804 = vmatpush1.bf16.msra.mxu0 0
      %805 = vmatprep.subr.bf16.mxu0 0
      %806 = vmatpush1.bf16.msra.mxu0 0
      %807 = vmatprep.subr.bf16.mxu0 0
      %808 = vmatpush1.bf16.msra.mxu0 0
      %809 = vmatprep.mubr.bf16.mxu0 0
      %810 = vmatmul.mubr.bf16.gmra.mrb[0].mxu0 %v772
      %v811 = vpop.f32.mrb[0].mxu0
      %v812 = vadd.f32 0.0, %v811
      %v813 = vpop.f32.mrb[0].mxu0
      %v814 = vpop.f32.mrb[0].mxu0
      %v815 = vpop.f32.mrb[0].mxu0
      %816 = vdwg.mxu0
      %v817 = vpack.i.b16 %v458, %v458
      %v818 = vlaneseq
      %v819 = vshrl.u32 %v818, 7
      %v820 = vsub.s32 0, %v819
      %v821 = vrot.slane %v817, %v820
      %v823 = vsel %vm412, %v821, 0
      %v826 = vsel %vm467, %v138, 0
      %828 = vmatprep.subr.bf16.mxu0 0
      %829 = vmatpush1.bf16.msra.mxu0 %v826
      %830 = vmatprep.subr.bf16.mxu0 0
      %831 = vmatpush1.bf16.msra.mxu0 0
      %832 = vmatprep.subr.bf16.mxu0 0
      %833 = vmatpush1.bf16.msra.mxu0 0
      %834 = vmatprep.subr.bf16.mxu0 0
      %835 = vmatpush1.bf16.msra.mxu0 0
      %836 = vmatprep.subr.bf16.mxu0 0
      %837 = vmatpush1.bf16.msra.mxu0 0
      %838 = vmatprep.subr.bf16.mxu0 0
      %839 = vmatpush1.bf16.msra.mxu0 0
      %840 = vmatprep.subr.bf16.mxu0 0
      %841 = vmatpush1.bf16.msra.mxu0 0
      %842 = vmatprep.subr.bf16.mxu0 0
      %843 = vmatpush1.bf16.msra.mxu0 0
      %844 = vmatprep.subr.bf16.mxu0 0
      %845 = vmatpush1.bf16.msra.mxu0 0
      %846 = vmatprep.subr.bf16.mxu0 0
      %847 = vmatpush1.bf16.msra.mxu0 0
      %848 = vmatprep.subr.bf16.mxu0 0
      %849 = vmatpush1.bf16.msra.mxu0 0
      %850 = vmatprep.subr.bf16.mxu0 0
      %851 = vmatpush1.bf16.msra.mxu0 0
      %852 = vmatprep.subr.bf16.mxu0 0
      %853 = vmatpush1.bf16.msra.mxu0 0
      %854 = vmatprep.subr.bf16.mxu0 0
      %855 = vmatpush1.bf16.msra.mxu0 0
      %856 = vmatprep.subr.bf16.mxu0 0
      %857 = vmatpush1.bf16.msra.mxu0 0
      %858 = vmatprep.subr.bf16.mxu0 0
      %859 = vmatpush1.bf16.msra.mxu0 0
      %860 = vmatprep.mubr.bf16.mxu0 0
      %861 = vmatmul.mubr.bf16.gmra.mrb[0].mxu0 %v823
      %v862 = vpop.f32.mrb[0].mxu0
      %v863 = vadd.f32 0.0, %v862
      %v864 = vpop.f32.mrb[0].mxu0
      %v865 = vpop.f32.mrb[0].mxu0
      %v866 = vpop.f32.mrb[0].mxu0
      %867 = vdwg.mxu0
      %v876 = vrot.slane %v557, 7
      %v877 = vsel %vm396, %v876, %v506
      %v878 = vrot.slane %v608, 6
      %v879 = vsel %vm398, %v878, %v877
      %v880 = vrot.slane %v659, 5
      %v881 = vsel %vm400, %v880, %v879
      %v882 = vrot.slane %v710, 4
      %v883 = vsel %vm402, %v882, %v881
      %v884 = vrot.slane %v761, 3
      %v885 = vsel %vm404, %v884, %v883
      %v886 = vrot.slane %v812, 2
      %v887 = vsel %vm406, %v886, %v885
      %v888 = vrot.slane %v863, 1
      %v889 = vsel %vm408, %v888, %v887
      %890 = vrot.lane.b32.xlu0 %v889, 16
      %v891 = vpop.permute.xlu0 %890
      %vm893 = vcmask 130048
      %v894 = vsel %vm893, %v130, %v891
      %v895 = vpack.c.bf16 %v894, %v894
      %v896 = vld [vmem:[%s7] sm:$0xf]
      %v897 = vld [vmem:[%s7 + $0x4] sm:$0xf]
      %v898 = vld [vmem:[%s7 + $0x8] sm:$0xf]
      %v899 = vld [vmem:[%s7 + $0xc] sm:$0xf]
      %v900 = vld [vmem:[%s7 + $0x10] sm:$0xf]
      %v901 = vld [vmem:[%s7 + $0x14] sm:$0xf]
      %v902 = vld [vmem:[%s13] sm:$0x1]
      %v903 = vlaneseq
      %v904 = vshrl.u32 %v903, 7
      %v905 = vsub.s32 0, %v904
      %v906 = vrot.slane %v902, %v905
      %v913 = vunpack.c.l.b16 %v896
      %v914 = vunpack.c.l.b16 %v897
      %v915 = vunpack.c.l.b16 %v898
      %v916 = vunpack.c.l.b16 %v899
      %v917 = vunpack.c.l.b16 %v900
      %v918 = vunpack.c.l.b16 %v901
      %v919 = vpack.c.b16 %v914, %v913
      %v920 = vpack.c.b16 %v916, %v915
      %v921 = vpack.c.b16 %v918, %v917
      %vm925 = vcmask 392192
      %v927 = vsel %vm925, %v895, 0
      %929 = vmatprep.subr.bf16.mxu0 0
      %930 = vmatpush1.bf16.msra.mxu0 %v919
      %931 = vmatprep.subr.bf16.mxu0 0
      %932 = vmatpush1.bf16.msra.mxu0 %v920
      %933 = vmatprep.subr.bf16.mxu0 0
      %934 = vmatpush1.bf16.msra.mxu0 %v921
      %935 = vmatprep.subr.bf16.mxu0 0
      %936 = vmatpush1.bf16.msra.mxu0 0
      %937 = vmatprep.subr.bf16.mxu0 0
      %938 = vmatpush1.bf16.msra.mxu0 0
      %939 = vmatprep.subr.bf16.mxu0 0
      %940 = vmatpush1.bf16.msra.mxu0 0
      %941 = vmatprep.subr.bf16.mxu0 0
      %942 = vmatpush1.bf16.msra.mxu0 0
      %943 = vmatprep.subr.bf16.mxu0 0
      %944 = vmatpush1.bf16.msra.mxu0 0
      %945 = vmatprep.subr.bf16.mxu0 0
      %946 = vmatpush1.bf16.msra.mxu0 0
      %947 = vmatprep.subr.bf16.mxu0 0
      %948 = vmatpush1.bf16.msra.mxu0 0
      %949 = vmatprep.subr.bf16.mxu0 0
      %950 = vmatpush1.bf16.msra.mxu0 0
      %951 = vmatprep.subr.bf16.mxu0 0
      %952 = vmatpush1.bf16.msra.mxu0 0
      %953 = vmatprep.subr.bf16.mxu0 0
      %954 = vmatpush1.bf16.msra.mxu0 0
      %955 = vmatprep.subr.bf16.mxu0 0
      %956 = vmatpush1.bf16.msra.mxu0 0
      %957 = vmatprep.subr.bf16.mxu0 0
      %958 = vmatpush1.bf16.msra.mxu0 0
      %959 = vmatprep.subr.bf16.mxu0 0
      %960 = vmatpush1.bf16.msra.mxu0 0
      %961 = vmatprep.mubr.bf16.mxu0 0
      %962 = vmatmul.mubr.bf16.gmra.mrb[0].mxu0 %v927
      %v963 = vpop.f32.mrb[0].mxu0
      %v964 = vadd.f32 %v906, %v963
      %v965 = vpop.f32.mrb[0].mxu0
      %v966 = vpop.f32.mrb[0].mxu0
      %v967 = vpop.f32.mrb[0].mxu0
      %968 = vdwg.mxu0
      %v969 = vld [vmem:[%s8] sm:$0xf]
      %v970 = vld [vmem:[%s8 + $0x4] sm:$0xf]
      %v971 = vld [vmem:[%s8 + $0x8] sm:$0xf]
      %v972 = vld [vmem:[%s8 + $0xc] sm:$0xf]
      %v973 = vld [vmem:[%s8 + $0x10] sm:$0xf]
      %v974 = vld [vmem:[%s8 + $0x14] sm:$0xf]
      %v975 = vld [vmem:[%s13 + $0x1] sm:$0x1]
      %v976 = vlaneseq
      %v977 = vshrl.u32 %v976, 7
      %v978 = vsub.s32 0, %v977
      %v979 = vrot.slane %v975, %v978
      %v986 = vunpack.c.l.b16 %v969
      %v987 = vunpack.c.l.b16 %v970
      %v988 = vunpack.c.l.b16 %v971
      %v989 = vunpack.c.l.b16 %v972
      %v990 = vunpack.c.l.b16 %v973
      %v991 = vunpack.c.l.b16 %v974
      %v992 = vpack.c.b16 %v987, %v986
      %v993 = vpack.c.b16 %v989, %v988
      %v994 = vpack.c.b16 %v991, %v990
      %998 = vmatprep.subr.bf16.mxu0 0
      %999 = vmatpush1.bf16.msra.mxu0 %v992
      %1000 = vmatprep.subr.bf16.mxu0 0
      %1001 = vmatpush1.bf16.msra.mxu0 %v993
      %1002 = vmatprep.subr.bf16.mxu0 0
      %1003 = vmatpush1.bf16.msra.mxu0 %v994
      %1004 = vmatprep.subr.bf16.mxu0 0
      %1005 = vmatpush1.bf16.msra.mxu0 0
      %1006 = vmatprep.subr.bf16.mxu0 0
      %1007 = vmatpush1.bf16.msra.mxu0 0
      %1008 = vmatprep.subr.bf16.mxu0 0
      %1009 = vmatpush1.bf16.msra.mxu0 0
      %1010 = vmatprep.subr.bf16.mxu0 0
      %1011 = vmatpush1.bf16.msra.mxu0 0
      %1012 = vmatprep.subr.bf16.mxu0 0
      %1013 = vmatpush1.bf16.msra.mxu0 0
      %1014 = vmatprep.subr.bf16.mxu0 0
      %1015 = vmatpush1.bf16.msra.mxu0 0
      %1016 = vmatprep.subr.bf16.mxu0 0
      %1017 = vmatpush1.bf16.msra.mxu0 0
      %1018 = vmatprep.subr.bf16.mxu0 0
      %1019 = vmatpush1.bf16.msra.mxu0 0
      %1020 = vmatprep.subr.bf16.mxu0 0
      %1021 = vmatpush1.bf16.msra.mxu0 0
      %1022 = vmatprep.subr.bf16.mxu0 0
      %1023 = vmatpush1.bf16.msra.mxu0 0
      %1024 = vmatprep.subr.bf16.mxu0 0
      %1025 = vmatpush1.bf16.msra.mxu0 0
      %1026 = vmatprep.subr.bf16.mxu0 0
      %1027 = vmatpush1.bf16.msra.mxu0 0
      %1028 = vmatprep.subr.bf16.mxu0 0
      %1029 = vmatpush1.bf16.msra.mxu0 0
      %1030 = vmatprep.mubr.bf16.mxu0 0
      %1031 = vmatmul.mubr.bf16.gmra.mrb[0].mxu0 %v927
      %v1032 = vpop.f32.mrb[0].mxu0
      %v1033 = vadd.f32 %v979, %v1032
      %v1034 = vpop.f32.mrb[0].mxu0
      %v1035 = vpop.f32.mrb[0].mxu0
      %v1036 = vpop.f32.mrb[0].mxu0
      %1037 = vdwg.mxu0
      %v1038 = vld [vmem:[%s9] sm:$0xf]
      %v1039 = vld [vmem:[%s9 + $0x4] sm:$0xf]
      %v1040 = vld [vmem:[%s9 + $0x8] sm:$0xf]
      %v1041 = vld [vmem:[%s9 + $0xc] sm:$0xf]
      %v1042 = vld [vmem:[%s9 + $0x10] sm:$0xf]
      %v1043 = vld [vmem:[%s9 + $0x14] sm:$0xf]
      %v1044 = vld [vmem:[%s13 + $0x2] sm:$0x1]
      %v1045 = vlaneseq
      %v1046 = vshrl.u32 %v1045, 7
      %v1047 = vsub.s32 0, %v1046
      %v1048 = vrot.slane %v1044, %v1047
      %v1055 = vunpack.c.l.b16 %v1038
      %v1056 = vunpack.c.l.b16 %v1039
      %v1057 = vunpack.c.l.b16 %v1040
      %v1058 = vunpack.c.l.b16 %v1041
      %v1059 = vunpack.c.l.b16 %v1042
      %v1060 = vunpack.c.l.b16 %v1043
      %v1061 = vpack.c.b16 %v1056, %v1055
      %v1062 = vpack.c.b16 %v1058, %v1057
      %v1063 = vpack.c.b16 %v1060, %v1059
      %1067 = vmatprep.subr.bf16.mxu0 0
      %1068 = vmatpush1.bf16.msra.mxu0 %v1061
      %1069 = vmatprep.subr.bf16.mxu0 0
      %1070 = vmatpush1.bf16.msra.mxu0 %v1062
      %1071 = vmatprep.subr.bf16.mxu0 0
      %1072 = vmatpush1.bf16.msra.mxu0 %v1063
      %1073 = vmatprep.subr.bf16.mxu0 0
      %1074 = vmatpush1.bf16.msra.mxu0 0
      %1075 = vmatprep.subr.bf16.mxu0 0
      %1076 = vmatpush1.bf16.msra.mxu0 0
      %1077 = vmatprep.subr.bf16.mxu0 0
      %1078 = vmatpush1.bf16.msra.mxu0 0
      %1079 = vmatprep.subr.bf16.mxu0 0
      %1080 = vmatpush1.bf16.msra.mxu0 0
      %1081 = vmatprep.subr.bf16.mxu0 0
      %1082 = vmatpush1.bf16.msra.mxu0 0
      %1083 = vmatprep.subr.bf16.mxu0 0
      %1084 = vmatpush1.bf16.msra.mxu0 0
      %1085 = vmatprep.subr.bf16.mxu0 0
      %1086 = vmatpush1.bf16.msra.mxu0 0
      %1087 = vmatprep.subr.bf16.mxu0 0
      %1088 = vmatpush1.bf16.msra.mxu0 0
      %1089 = vmatprep.subr.bf16.mxu0 0
      %1090 = vmatpush1.bf16.msra.mxu0 0
      %1091 = vmatprep.subr.bf16.mxu0 0
      %1092 = vmatpush1.bf16.msra.mxu0 0
      %1093 = vmatprep.subr.bf16.mxu0 0
      %1094 = vmatpush1.bf16.msra.mxu0 0
      %1095 = vmatprep.subr.bf16.mxu0 0
      %1096 = vmatpush1.bf16.msra.mxu0 0
      %1097 = vmatprep.subr.bf16.mxu0 0
      %1098 = vmatpush1.bf16.msra.mxu0 0
      %1099 = vmatprep.mubr.bf16.mxu0 0
      %1100 = vmatmul.mubr.bf16.gmra.mrb[0].mxu0 %v927
      %v1101 = vpop.f32.mrb[0].mxu0
      %v1102 = vadd.f32 %v1048, %v1101
      %v1103 = vpop.f32.mrb[0].mxu0
      %v1104 = vpop.f32.mrb[0].mxu0
      %v1105 = vpop.f32.mrb[0].mxu0
      %1106 = vdwg.mxu0
      %v1107 = vld [vmem:[%s10] sm:$0xf]
      %v1108 = vld [vmem:[%s10 + $0x4] sm:$0xf]
      %v1109 = vld [vmem:[%s10 + $0x8] sm:$0xf]
      %v1110 = vld [vmem:[%s10 + $0xc] sm:$0xf]
      %v1111 = vld [vmem:[%s14] sm:$0x1]
      %v1112 = vlaneseq
      %v1113 = vshrl.u32 %v1112, 7
      %v1114 = vsub.s32 0, %v1113
      %v1115 = vrot.slane %v1111, %v1114
      %v1120 = vunpack.c.l.b16 %v1107
      %v1121 = vunpack.c.l.b16 %v1108
      %v1122 = vunpack.c.l.b16 %v1109
      %v1123 = vunpack.c.l.b16 %v1110
      %v1124 = vpack.c.b16 %v1121, %v1120
      %v1125 = vpack.c.b16 %v1123, %v1122
      %1128 = vmatprep.subr.bf16.mxu0 0
      %1129 = vmatpush1.bf16.msra.mxu0 %v1124
      %1130 = vmatprep.subr.bf16.mxu0 0
      %1131 = vmatpush1.bf16.msra.mxu0 %v1125
      %1132 = vmatprep.subr.bf16.mxu0 0
      %1133 = vmatpush1.bf16.msra.mxu0 0
      %1134 = vmatprep.subr.bf16.mxu0 0
      %1135 = vmatpush1.bf16.msra.mxu0 0
      %1136 = vmatprep.subr.bf16.mxu0 0
      %1137 = vmatpush1.bf16.msra.mxu0 0
      %1138 = vmatprep.subr.bf16.mxu0 0
      %1139 = vmatpush1.bf16.msra.mxu0 0
      %1140 = vmatprep.subr.bf16.mxu0 0
      %1141 = vmatpush1.bf16.msra.mxu0 0
      %1142 = vmatprep.subr.bf16.mxu0 0
      %1143 = vmatpush1.bf16.msra.mxu0 0
      %1144 = vmatprep.subr.bf16.mxu0 0
      %1145 = vmatpush1.bf16.msra.mxu0 0
      %1146 = vmatprep.subr.bf16.mxu0 0
      %1147 = vmatpush1.bf16.msra.mxu0 0
      %1148 = vmatprep.subr.bf16.mxu0 0
      %1149 = vmatpush1.bf16.msra.mxu0 0
      %1150 = vmatprep.subr.bf16.mxu0 0
      %1151 = vmatpush1.bf16.msra.mxu0 0
      %1152 = vmatprep.subr.bf16.mxu0 0
      %1153 = vmatpush1.bf16.msra.mxu0 0
      %1154 = vmatprep.subr.bf16.mxu0 0
      %1155 = vmatpush1.bf16.msra.mxu0 0
      %1156 = vmatprep.subr.bf16.mxu0 0
      %1157 = vmatpush1.bf16.msra.mxu0 0
      %1158 = vmatprep.subr.bf16.mxu0 0
      %1159 = vmatpush1.bf16.msra.mxu0 0
      %1160 = vmatprep.mubr.bf16.mxu0 0
      %1161 = vmatmul.mubr.bf16.gmra.mrb[0].mxu0 %v158
      %v1162 = vpop.f32.mrb[0].mxu0
      %v1163 = vadd.f32 %v1115, %v1162
      %v1164 = vpop.f32.mrb[0].mxu0
      %v1165 = vpop.f32.mrb[0].mxu0
      %v1166 = vpop.f32.mrb[0].mxu0
      %1167 = vdwg.mxu0
      %v1168 = vld [vmem:[%s11] sm:$0xf]
      %v1169 = vld [vmem:[%s11 + $0x4] sm:$0xf]
      %v1170 = vld [vmem:[%s11 + $0x8] sm:$0xf]
      %v1171 = vld [vmem:[%s11 + $0xc] sm:$0xf]
      %v1172 = vld [vmem:[%s14 + $0x1] sm:$0x1]
      %v1173 = vlaneseq
      %v1174 = vshrl.u32 %v1173, 7
      %v1175 = vsub.s32 0, %v1174
      %v1176 = vrot.slane %v1172, %v1175
      %v1181 = vunpack.c.l.b16 %v1168
      %v1182 = vunpack.c.l.b16 %v1169
      %v1183 = vunpack.c.l.b16 %v1170
      %v1184 = vunpack.c.l.b16 %v1171
      %v1185 = vpack.c.b16 %v1182, %v1181
      %v1186 = vpack.c.b16 %v1184, %v1183
      %1189 = vmatprep.subr.bf16.mxu0 0
      %1190 = vmatpush1.bf16.msra.mxu0 %v1185
      %1191 = vmatprep.subr.bf16.mxu0 0
      %1192 = vmatpush1.bf16.msra.mxu0 %v1186
      %1193 = vmatprep.subr.bf16.mxu0 0
      %1194 = vmatpush1.bf16.msra.mxu0 0
      %1195 = vmatprep.subr.bf16.mxu0 0
      %1196 = vmatpush1.bf16.msra.mxu0 0
      %1197 = vmatprep.subr.bf16.mxu0 0
      %1198 = vmatpush1.bf16.msra.mxu0 0
      %1199 = vmatprep.subr.bf16.mxu0 0
      %1200 = vmatpush1.bf16.msra.mxu0 0
      %1201 = vmatprep.subr.bf16.mxu0 0
      %1202 = vmatpush1.bf16.msra.mxu0 0
      %1203 = vmatprep.subr.bf16.mxu0 0
      %1204 = vmatpush1.bf16.msra.mxu0 0
      %1205 = vmatprep.subr.bf16.mxu0 0
      %1206 = vmatpush1.bf16.msra.mxu0 0
      %1207 = vmatprep.subr.bf16.mxu0 0
      %1208 = vmatpush1.bf16.msra.mxu0 0
      %1209 = vmatprep.subr.bf16.mxu0 0
      %1210 = vmatpush1.bf16.msra.mxu0 0
      %1211 = vmatprep.subr.bf16.mxu0 0
      %1212 = vmatpush1.bf16.msra.mxu0 0
      %1213 = vmatprep.subr.bf16.mxu0 0
      %1214 = vmatpush1.bf16.msra.mxu0 0
      %1215 = vmatprep.subr.bf16.mxu0 0
      %1216 = vmatpush1.bf16.msra.mxu0 0
      %1217 = vmatprep.subr.bf16.mxu0 0
      %1218 = vmatpush1.bf16.msra.mxu0 0
      %1219 = vmatprep.subr.bf16.mxu0 0
      %1220 = vmatpush1.bf16.msra.mxu0 0
      %1221 = vmatprep.mubr.bf16.mxu0 0
      %1222 = vmatmul.mubr.bf16.gmra.mrb[0].mxu0 %v158
      %v1223 = vpop.f32.mrb[0].mxu0
      %v1224 = vadd.f32 %v1176, %v1223
      %v1225 = vpop.f32.mrb[0].mxu0
      %v1226 = vpop.f32.mrb[0].mxu0
      %v1227 = vpop.f32.mrb[0].mxu0
      %1228 = vdwg.mxu0
      %v1229 = vld [vmem:[#allocation11] sm:$0xf]
      %v1230 = vld [vmem:[#allocation11 + $0x4] sm:$0xf]
      %v1231 = vld [vmem:[#allocation11 + $0x8] sm:$0xf]
      %v1232 = vld [vmem:[#allocation11 + $0xc] sm:$0xf]
      %v1233 = vld [vmem:[%s14 + $0x2] sm:$0x1]
      %v1234 = vlaneseq
      %v1235 = vshrl.u32 %v1234, 7
      %v1236 = vsub.s32 0, %v1235
      %v1237 = vrot.slane %v1233, %v1236
      %v1242 = vunpack.c.l.b16 %v1229
      %v1243 = vunpack.c.l.b16 %v1230
      %v1244 = vunpack.c.l.b16 %v1231
      %v1245 = vunpack.c.l.b16 %v1232
      %v1246 = vpack.c.b16 %v1243, %v1242
      %v1247 = vpack.c.b16 %v1245, %v1244
      %1250 = vmatprep.subr.bf16.mxu0 0
      %1251 = vmatpush1.bf16.msra.mxu0 %v1246
      %1252 = vmatprep.subr.bf16.mxu0 0
      %1253 = vmatpush1.bf16.msra.mxu0 %v1247
      %1254 = vmatprep.subr.bf16.mxu0 0
      %1255 = vmatpush1.bf16.msra.mxu0 0
      %1256 = vmatprep.subr.bf16.mxu0 0
      %1257 = vmatpush1.bf16.msra.mxu0 0
      %1258 = vmatprep.subr.bf16.mxu0 0
      %1259 = vmatpush1.bf16.msra.mxu0 0
      %1260 = vmatprep.subr.bf16.mxu0 0
      %1261 = vmatpush1.bf16.msra.mxu0 0
      %1262 = vmatprep.subr.bf16.mxu0 0
      %1263 = vmatpush1.bf16.msra.mxu0 0
      %1264 = vmatprep.subr.bf16.mxu0 0
      %1265 = vmatpush1.bf16.msra.mxu0 0
      %1266 = vmatprep.subr.bf16.mxu0 0
      %1267 = vmatpush1.bf16.msra.mxu0 0
      %1268 = vmatprep.subr.bf16.mxu0 0
      %1269 = vmatpush1.bf16.msra.mxu0 0
      %1270 = vmatprep.subr.bf16.mxu0 0
      %1271 = vmatpush1.bf16.msra.mxu0 0
      %1272 = vmatprep.subr.bf16.mxu0 0
      %1273 = vmatpush1.bf16.msra.mxu0 0
      %1274 = vmatprep.subr.bf16.mxu0 0
      %1275 = vmatpush1.bf16.msra.mxu0 0
      %1276 = vmatprep.subr.bf16.mxu0 0
      %1277 = vmatpush1.bf16.msra.mxu0 0
      %1278 = vmatprep.subr.bf16.mxu0 0
      %1279 = vmatpush1.bf16.msra.mxu0 0
      %1280 = vmatprep.subr.bf16.mxu0 0
      %1281 = vmatpush1.bf16.msra.mxu0 0
      %1282 = vmatprep.mubr.bf16.mxu0 0
      %1283 = vmatmul.mubr.bf16.gmra.mrb[0].mxu0 %v158
      %v1284 = vpop.f32.mrb[0].mxu0
      %v1285 = vadd.f32 %v1237, %v1284
      %v1286 = vpop.f32.mrb[0].mxu0
      %v1287 = vpop.f32.mrb[0].mxu0
      %v1288 = vpop.f32.mrb[0].mxu0
      %1289 = vdwg.mxu0
      %v1290 = vadd.f32 %v964, %v1163
      %v1291 = vxor.u32 %v1290, 2147483648
      %v1292 = vmul.f32 %v1291, 1.442695
      %v1293 = vpow.pop %v1292
      %v1294 = vadd.f32 %v1293, 1.0
      %v1295 = vrcp.pop %v1294
      %v1296 = vmul.f32 1.0, %v1295
      %v1297 = vadd.f32 %v1033, %v1224
      %v1298 = vxor.u32 %v1297, 2147483648
      %v1299 = vmul.f32 %v1298, 1.442695
      %v1300 = vpow.pop %v1299
      %v1301 = vadd.f32 %v1300, 1.0
      %v1302 = vrcp.pop %v1301
      %v1303 = vmul.f32 1.0, %v1302
      %v1304 = vmul.f32 %v1296, %v1285
      %v1305 = vadd.f32 %v1102, %v1304
      %v1306 = vtanh.pop %v1305
      %v1307 = vsub.f32 1.0, %v1303
      %v1308 = vmul.f32 %v1307, %v1306
      %v1309 = vmul.f32 %v1303, %v128
      %v1310 = vadd.f32 %v1308, %v1309
      %1311 = vst.msk [vmem:[#allocation13] sm:$0xff] %vm156, %v1310
      %1312 = vrot.lane.b32.xlu0 %v889, 32
      %v1313 = vpop.permute.xlu0 %1312
      %1316 = vrot.lane.b32.xlu0 %v130, 64
      %v1317 = vpop.permute.xlu0 %1316
      %v1319 = vsel %vm156, %v1310, %v1313
      %vm1320 = vcmask 523264
      %v1321 = vsel %vm1320, %v1319, %v1317
      %v1322 = vpack.c.bf16 %v1321, %v1321
      %vm1323 = vcmask 650240
      %1324 = vst.msk [vmem:[#allocation2] sm:$0xf] %vm1323, %v1322
    $region93: #{tpu_custom_call.1} parent=1 // pred_fallthru
      _
    %v1325 = vld [vmem:[#allocation2] sm:$0xf]
    %v1326 = vld [vmem:[%s15] sm:$0xf]
    %v1327 = vld [vmem:[%s15 + $0x4] sm:$0xf]
    %v1328 = vld [vmem:[%s15 + $0x8] sm:$0xf]
    %v1329 = vld [vmem:[%s15 + $0xc] sm:$0xf]
    %v1330 = vld [vmem:[%s15 + $0x10] sm:$0xf]
    %v1331 = vld [vmem:[%s15 + $0x14] sm:$0xf]
    %v1332 = vld [vmem:[%s15 + $0x18] sm:$0xf]
    %v1333 = vld [vmem:[%s15 + $0x1c] sm:$0xf]
    %v1334 = vld [vmem:[%s15 + $0x20] sm:$0xf]
    %v1335 = vld [vmem:[%s15 + $0x24] sm:$0xf]
    %v1336 = vld [vmem:[%s16] sm:$0x1]
    %v1338 = vlaneseq
    %v1339 = vshrl.u32 %v1338, 7
    %v1340 = vsub.s32 0, %v1339
    %v1341 = vrot.slane %v1336, %v1340
    %v1353 = vunpack.c.l.b16 %v1326
    %v1354 = vunpack.c.l.b16 %v1327
    %v1355 = vunpack.c.l.b16 %v1328
    %v1356 = vunpack.c.l.b16 %v1329
    %v1357 = vunpack.c.l.b16 %v1330
    %v1358 = vunpack.c.l.b16 %v1331
    %v1359 = vunpack.c.l.b16 %v1332
    %v1360 = vunpack.c.l.b16 %v1333
    %v1361 = vunpack.c.l.b16 %v1334
    %v1362 = vunpack.c.l.b16 %v1335
    %v1363 = vpack.c.b16 %v1354, %v1353
    %v1364 = vpack.c.b16 %v1356, %v1355
    %v1365 = vpack.c.b16 %v1358, %v1357
    %v1366 = vpack.c.b16 %v1360, %v1359
    %v1367 = vpack.c.b16 %v1362, %v1361
    %vm1373 = vcmask 654336
    %v1375 = vsel %vm1373, %v1325, 0
    %1377 = vmatprep.subr.bf16.mxu0 0
    %1378 = vmatpush1.bf16.msra.mxu0 %v1363
    %1379 = vmatprep.subr.bf16.mxu0 0
    %1380 = vmatpush1.bf16.msra.mxu0 %v1364
    %1381 = vmatprep.subr.bf16.mxu0 0
    %1382 = vmatpush1.bf16.msra.mxu0 %v1365
    %1383 = vmatprep.subr.bf16.mxu0 0
    %1384 = vmatpush1.bf16.msra.mxu0 %v1366
    %1385 = vmatprep.subr.bf16.mxu0 0
    %1386 = vmatpush1.bf16.msra.mxu0 %v1367
    %1387 = vmatprep.subr.bf16.mxu0 0
    %1388 = vmatpush1.bf16.msra.mxu0 0
    %1389 = vmatprep.subr.bf16.mxu0 0
    %1390 = vmatpush1.bf16.msra.mxu0 0
    %1391 = vmatprep.subr.bf16.mxu0 0
    %1392 = vmatpush1.bf16.msra.mxu0 0
    %1393 = vmatprep.subr.bf16.mxu0 0
    %1394 = vmatpush1.bf16.msra.mxu0 0
    %1395 = vmatprep.subr.bf16.mxu0 0
    %1396 = vmatpush1.bf16.msra.mxu0 0
    %1397 = vmatprep.subr.bf16.mxu0 0
    %1398 = vmatpush1.bf16.msra.mxu0 0
    %1399 = vmatprep.subr.bf16.mxu0 0
    %1400 = vmatpush1.bf16.msra.mxu0 0
    %1401 = vmatprep.subr.bf16.mxu0 0
    %1402 = vmatpush1.bf16.msra.mxu0 0
    %1403 = vmatprep.subr.bf16.mxu0 0
    %1404 = vmatpush1.bf16.msra.mxu0 0
    %1405 = vmatprep.subr.bf16.mxu0 0
    %1406 = vmatpush1.bf16.msra.mxu0 0
    %1407 = vmatprep.subr.bf16.mxu0 0
    %1408 = vmatpush1.bf16.msra.mxu0 0
    %1409 = vmatprep.mubr.bf16.mxu0 0
    %1410 = vmatmul.mubr.bf16.gmra.mrb[0].mxu0 %v1375
    %v1411 = vpop.f32.mrb[0].mxu0
    %v1412 = vadd.f32 %v1341, %v1411
    %v1413 = vpop.f32.mrb[0].mxu0
    %v1414 = vpop.f32.mrb[0].mxu0
    %v1415 = vpop.f32.mrb[0].mxu0
    %1416 = vdwg.mxu0
    %1417 = vst [vmem:[#allocation12] sm:$0xff] %v1412
    // Predicated region
    $region94: #{tpu_custom_call.1} parent=1 // pred_check
      _
    $region95: #{tpu_custom_call.1} parent=1 // pred_check_branch
      %1419 = sbr.rel (0) target = $region97
    $region96: #{tpu_custom_call.1} parent=1 // pred_region
      %s1421 = ssub.s32 128, 128
      %1422 = vsyncadd [#allocation5], %s1421
      %s1424 = sshll.u32 [#allocation12], 4
      %s1425 = int_to_ptr.vmem [resolvable:$true] %s1424
      %1427 = dma.vmem_to_hbm [thread:$0]  %s1425, 128, %s17, [#allocation5]
    $region97: #{tpu_custom_call.1} parent=1 // pred_fallthru
      _
    // Predicated region
    $region98: #{tpu_custom_call.1} parent=1 // pred_check
      _
    $region99: #{tpu_custom_call.1} parent=1 // pred_check_branch
      %1429 = sbr.rel (0) target = $region101
    $region100: #{tpu_custom_call.1} parent=1 // pred_region
      %s1431 = ssub.s32 128, 128
      %1432 = vsyncadd [#allocation14], %s1431
      %s1434 = sshll.u32 [#allocation13], 4
      %s1435 = int_to_ptr.vmem [resolvable:$true] %s1434
      %1437 = dma.vmem_to_hbm [thread:$0]  %s1435, 128, %s18, [#allocation14]
    $region101: #{tpu_custom_call.1} parent=1 // pred_fallthru
      _
    // Predicated region
    $region102: #{tpu_custom_call.1} parent=1 // pred_check
      _
    $region103: #{tpu_custom_call.1} parent=1 // pred_check_branch
      %1439 = sbr.rel (0) target = $region105
    $region104: #{tpu_custom_call.1} parent=1 // pred_region
      %s1441 = ssub.s32 128, 128
      %1442 = vsyncadd [#allocation14], %s1441
      %s1444 = sshll.u32 [#allocation15], 4
      %s1445 = int_to_ptr.vmem [resolvable:$true] %s1444
      %1447 = dma.vmem_to_hbm [thread:$0]  %s1445, 128, %s19, [#allocation14]
    $region105: #{tpu_custom_call.1} parent=1 // pred_fallthru
      _
    // Predicated region
    $region106: #{tpu_custom_call.1} parent=1 // pred_check
      _
    $region107: #{tpu_custom_call.1} parent=1 // pred_check_branch
      %1449 = sbr.rel (0) target = $region109
    $region108: #{tpu_custom_call.1} parent=1 // pred_region
      %1450 = dma.done [#allocation5], 128
    $region109: #{tpu_custom_call.1} parent=1 // pred_fallthru
      _
    // Predicated region
    $region110: #{tpu_custom_call.1} parent=1 // pred_check
      _
    $region111: #{tpu_custom_call.1} parent=1 // pred_check_branch
      %1452 = sbr.rel (0) target = $region113
    $region112: #{tpu_custom_call.1} parent=1 // pred_region
      %1453 = dma.done [#allocation14], 128
    $region113: #{tpu_custom_call.1} parent=1 // pred_fallthru
      _
    // Predicated region
    $region114: #{tpu_custom_call.1} parent=1 // pred_check
      _
    $region115: #{tpu_custom_call.1} parent=1 // pred_check_branch
      %1455 = sbr.rel (0) target = $region117
    $region116: #{tpu_custom_call.1} parent=1 // pred_region
      %1456 = dma.done [#allocation14], 128
    $region117: #{tpu_custom_call.1} parent=1 // pred_fallthru
      _
    %1457 = vsyncpa [#allocation4], 1
    %1458 = vsyncpa [#allocation7], 1
    %1459 = vsyncpa [#allocation10], 1
    %1460 = vsyncpa [#allocation5], 1
    %1461 = vsyncpa [#allocation14], 1

</llo_original>
